<compile_context>
chip_gen: v7x
topology: tpu7x:2x2x1
jax: 0.10.0
libtpu: 0.0.40
codegen_flags: <defaults>
</compile_context>

<pallas_src>
import functools
import math

import numpy as np
import jax
import jax.numpy as jnp
from jax.experimental import pallas as pl
from jax.experimental.pallas import tpu as pltpu


# -----------------------------------------------------------------------------
# Positional encoding (same semantics as positionalencoding2d in the reference)
# -----------------------------------------------------------------------------
def positionalencoding2d(D, H, W):
    if D % 4 != 0:
        raise ValueError("D must be divisible by 4")
    P = np.zeros((D, H, W), dtype=np.float32)
    D2 = D // 2
    div_term = np.exp(np.arange(0.0, D2, 2) * -(math.log(10000.0) / D2))  # (D2//2,)
    pos_w = np.arange(0.0, W)[:, None]                                    # (W, 1)
    pos_h = np.arange(0.0, H)[:, None]                                    # (H, 1)
    P[0:D2:2, :, :] = np.repeat(np.sin(pos_w * div_term).T[:, None, :], H, axis=1)
    P[1:D2:2, :, :] = np.repeat(np.cos(pos_w * div_term).T[:, None, :], H, axis=1)
    P[D2::2, :, :] = np.repeat(np.sin(pos_h * div_term).T[:, :, None], W, axis=2)
    P[D2 + 1::2, :, :] = np.repeat(np.cos(pos_h * div_term).T[:, :, None], W, axis=2)
    return P


def _choose_token_tile(N):
    """Largest multiple-of-128 token tile (<=512, which bounds the f32 (2Hd, TN)
    intermediates) that divides N; fall back to the full extent (a block equal
    to the full array dim is always legal)."""
    for tn in (512, 384, 256, 128):
        if N % tn == 0:
            return tn
    return N


# -----------------------------------------------------------------------------
# Pallas kernel: one (token-tile, batch) block per grid step.
# Fused weights (channels-out on sublanes):
#   w1f (2Hd, C)     : [w1^T ; u1^T]                     bias b1f (2Hd, 1) = [b1^T ; c1^T]
#   w2f (2Hd, 2Hd)   : blockdiag(w2^T, u2^T)             bias b2f (2Hd, 1)
#   w3f (2C+M, 2Hd)  : [w3^T | 0 ; 0 | u3^T ; (w3@ks)^T | 0]   (ks = 5*K_hat^T folds
#                      the K-bank cosine numerator and the 1/0.2 temperature)
#   b3f (2C+M, 1)    : [b3^T ; c3^T ; (b3@ks)^T]
# -----------------------------------------------------------------------------
def rar_kernel(num_item, C, Hd,
               x_ref, posw1_ref,
               w1_ref, b1_ref, w2_ref, b2_ref, w3_ref, b3_ref,
               recons_ref, score_ref):
    x = x_ref[0]                                   # (C, TN) f32
    x_bf = x.astype(jnp.bfloat16)                  # MXU operand (bf16)

    # Fused q / noise / logits MLP: three lane-dense bf16 MXU pushes, f32 acc.
    z = jnp.dot(w1_ref[...], x_bf, preferred_element_type=jnp.float32) + b1_ref[...]
    # pos @ w1 is added to the q-hidden rows only (noise path has no pos term).
    z = jnp.concatenate([z[:Hd] + posw1_ref[...], z[Hd:]], axis=0)
    z = jnp.maximum(z, 0.0).astype(jnp.bfloat16)
    z = jnp.dot(w2_ref[...], z, preferred_element_type=jnp.float32) + b2_ref[...]
    z = jnp.maximum(z, 0.0).astype(jnp.bfloat16)
    z = jnp.dot(w3_ref[...], z, preferred_element_type=jnp.float32) + b3_ref[...]
    # z rows: [0:C] = q, [C:2C] = noise pre-activation, [2C:2C+M] = q @ ks.

    q = z[:C]                                                     # (C, TN)
    noise = jnp.tanh(z[C:2 * C])                                  # bounded in (-1,1)
    inv_qn = jax.lax.rsqrt(jnp.sum(q * q, axis=0, keepdims=True))  # EUP; matches ref /0 behavior
    logits = z[2 * C:] * inv_qn                                   # (M, TN) cosine / 0.2

    # Softmax over the M key rows (sublanes), then sum of the second half.
    m = jnp.max(logits, axis=0, keepdims=True)
    e = jnp.exp(logits - m)
    score = (jnp.sum(e[num_item:], axis=0, keepdims=True) /
             jnp.sum(e, axis=0, keepdims=True))                   # (1, TN), exact divide

    v = noise * x                                                 # (C, TN)
    recons_ref[0] = (score * v).astype(recons_ref.dtype)          # lane-dense store
    score_ref[0] = score.astype(score_ref.dtype)                  # lane-dense store


# -----------------------------------------------------------------------------
# Wrapper
# -----------------------------------------------------------------------------
def rar_single_forward(x_nchw, params, pos_enc, num_item):
    """x_nchw: (B, C, H, W).  Returns (recons NCHW, attention_scores (B, N, 1))."""
    B, C, H, W = x_nchw.shape
    N = H * W
    Hd = params["w1"].shape[1]
    M = params["K"].shape[0]
    HI = jax.lax.Precision.HIGHEST

    # Native channels-on-sublanes layout: pure reshapes, no HBM transposes.
    x = x_nchw.reshape(B, C, N)
    pos = pos_enc.reshape(C, N)

    # ---- grid-invariant preprocessing (tiny, XLA side) ----
    w1f = jnp.concatenate([params["w1"], params["u1"]], axis=1).T              # (2Hd, C)
    b1f = jnp.concatenate([params["b1"], params["c1"]], axis=1).T              # (2Hd, 1)
    posw1 = jnp.dot(params["w1"].T, pos, precision=HI)                         # (Hd, N)

    zed = jnp.zeros((Hd, Hd), jnp.float32)
    w2f = jnp.concatenate(
        [jnp.concatenate([params["w2"].T, zed], axis=1),
         jnp.concatenate([zed, params["u2"].T], axis=1)], axis=0)              # (2Hd, 2Hd)
    b2f = jnp.concatenate([params["b2"], params["c2"]], axis=1).T              # (2Hd, 1)

    # Pre-normalized key bank with the 1/0.2 temperature folded in, then folded
    # into the last fused layer (extra M output rows) -> logits come for free.
    k = params["K"]
    ks = (k / jnp.linalg.norm(k, axis=-1, keepdims=True) * 5.0).T              # (C, M)
    zc = jnp.zeros((C, Hd), jnp.float32)
    zm = jnp.zeros((M, Hd), jnp.float32)
    w3f = jnp.concatenate(
        [jnp.concatenate([params["w3"].T, zc], axis=1),
         jnp.concatenate([zc, params["u3"].T], axis=1),
         jnp.concatenate([jnp.dot(params["w3"], ks, precision=HI).T, zm], axis=1)],
        axis=0)                                                                # (2C+M, 2Hd)
    b3f = jnp.concatenate(
        [params["b3"], params["c3"], jnp.dot(params["b3"], ks, precision=HI)],
        axis=1).T                                                              # (2C+M, 1)

    # bf16 MXU operands (weights); x is cast in-kernel so v = noise*x stays exact
    # and the wrapper avoids an extra HBM pass over x.
    w1f = w1f.astype(jnp.bfloat16)
    w2f = w2f.astype(jnp.bfloat16)
    w3f = w3f.astype(jnp.bfloat16)

    TN = _choose_token_tile(N)
    grid = (N // TN, B)   # batch innermost: pos block index constant across it
    const = lambda shp: pl.BlockSpec(shp, lambda t, b: (0, 0))

    recons, score = pl.pallas_call(
        functools.partial(rar_kernel, num_item, C, Hd),
        out_shape=(
            jax.ShapeDtypeStruct((B, C, N), jnp.float32),
            jax.ShapeDtypeStruct((B, 1, N), jnp.float32),
        ),
        grid=grid,
        in_specs=[
            pl.BlockSpec((1, C, TN), lambda t, b: (b, 0, t)),   # x
            pl.BlockSpec((Hd, TN), lambda t, b: (0, t)),        # pos @ w1
            const((2 * Hd, C)),                                 # w1f (bf16)
            const((2 * Hd, 1)),                                 # b1f
            const((2 * Hd, 2 * Hd)),                            # w2f (bf16, block-diag)
            const((2 * Hd, 1)),                                 # b2f
            const((2 * C + M, 2 * Hd)),                         # w3f (bf16, K folded in)
            const((2 * C + M, 1)),                              # b3f
        ],
        out_specs=(
            pl.BlockSpec((1, C, TN), lambda t, b: (b, 0, t)),   # recons, lane-dense
            pl.BlockSpec((1, 1, TN), lambda t, b: (b, 0, t)),   # score, lane-dense
        ),
        compiler_params=pltpu.CompilerParams(
            dimension_semantics=("parallel", "parallel")),
    )(x, posw1, w1f, b1f, w2f, b2f, w3f, b3f)

    # (B, C, N) is already NCHW token ordering; reshapes are free.
    recons_nchw = recons.reshape(B, C, H, W)
    score_out = score.reshape(B, N, 1)
    return recons_nchw, score_out


# -----------------------------------------------------------------------------
# Pure-JAX reference (unfused math, HIGHEST precision) for a sanity check
# -----------------------------------------------------------------------------
def rar_single_reference(x_nchw, params, pos_enc, num_item):
    B, C, H, W = x_nchw.shape
    N = H * W
    x = jnp.transpose(x_nchw, (0, 2, 3, 1)).reshape(B, N, C)
    pos = jnp.transpose(pos_enc, (1, 2, 0)).reshape(N, C)
    hi = jax.lax.Precision.HIGHEST
    mlp = lambda z, w1, b1, w2, b2, w3, b3: (
        jnp.dot(jnp.maximum(jnp.dot(jnp.maximum(jnp.dot(z, w1, precision=hi) + b1, 0.0),
                                    w2, precision=hi) + b2, 0.0), w3, precision=hi) + b3)
    q = mlp(x + pos, params["w1"], params["b1"], params["w2"], params["b2"],
            params["w3"], params["b3"])
    noise = mlp(x, params["u1"], params["c1"], params["u2"], params["c2"],
                params["u3"], params["c3"])
    noise = jnp.clip(jnp.tanh(noise), -1.0, 1.0)
    v = noise * x
    k = params["K"]
    cos = jnp.einsum("bnc,mc->bnm", q, k, precision=hi)
    cos = cos / (jnp.linalg.norm(q, axis=-1, keepdims=True) *
                 jnp.linalg.norm(k, axis=-1)[None, None, :])
    att = jax.nn.softmax(cos / 0.2, axis=-1)
    score = jnp.sum(att[:, :, num_item:], axis=-1, keepdims=True)
    recons = score * v
    recons_nchw = jnp.transpose(recons.reshape(B, H, W, C), (0, 3, 1, 2))
    return recons_nchw, score


# -----------------------------------------------------------------------------
# Main
# -----------------------------------------------------------------------------
if __name__ == "__main__":
    # Small, consistent shapes: d_model=[32], size_list=[16], num_item=8
    B, C, H, W = 2, 32, 16, 16
    num_item = 8
    M = 2 * num_item
    hidden = min(2 * C, 1024)   # 64

    key = jax.random.PRNGKey(0)
    ks = jax.random.split(key, 16)

    def init(k, shape, fan_in):
        return (jax.random.normal(k, shape, dtype=jnp.float32) /
                jnp.sqrt(fan_in)).astype(jnp.float32)

    params = {
        # projs (q path): C -> hidden -> hidden -> C
        "w1": init(ks[0], (C, hidden), C),      "b1": init(ks[1], (1, hidden), hidden),
        "w2": init(ks[2], (hidden, hidden), hidden), "b2": init(ks[3], (1, hidden), hidden),
        "w3": init(ks[4], (hidden, C), hidden), "b3": init(ks[5], (1, C), C),
        # projs2 (noise path)
        "u1": init(ks[6], (C, hidden), C),      "c1": init(ks[7], (1, hidden), hidden),
        "u2": init(ks[8], (hidden, hidden), hidden), "c2": init(ks[9], (1, hidden), hidden),
        "u3": init(ks[10], (hidden, C), hidden), "c3": init(ks[11], (1, C), C),
        # K bank: (2*num_item, C)  (torch stores (1, 2*num_item, C); batch dim broadcast)
        "K": jax.random.normal(ks[12], (M, C), dtype=jnp.float32),
    }

    pos_enc = jnp.asarray(positionalencoding2d(C, H, W))   # (C, H, W)
    x = jax.random.normal(ks[13], (B, C, H, W), dtype=jnp.float32)

    # TODO(synk): the atten_mask branch (AdaptiveAvgPool2d resize + >0.3 threshold)
    # is not implemented; this kernel covers the atten_mask=None path only.

    recons, score = rar_single_forward(x, params, pos_enc, num_item)
    jax.block_until_ready((recons, score))

    ref_recons, ref_score = rar_single_reference(x, params, pos_enc, num_item)
    assert recons.shape == (B, C, H, W) and score.shape == (B, H * W, 1)
    # Tolerance relaxed from 1e-2 -> 5e-2: MXU operands are bf16 (f32 accumulate)
    # per the performance review; elementwise math remains f32.
    np.testing.assert_allclose(np.asarray(recons), np.asarray(ref_recons),
                               rtol=5e-2, atol=5e-2)
    np.testing.assert_allclose(np.asarray(score), np.asarray(ref_score),
                               rtol=5e-2, atol=5e-2)
    print("KERNEL_OK")
</pallas_src>

<mosaic_0001>
module attributes {stable_mosaic.version = 11 : i64} {
  func.func @rar_kernel(%arg0: i32, %arg1: i32, %arg2: memref<1x32x256xf32, #tpu.memory_space<vmem>>, %arg3: memref<64x256xf32, #tpu.memory_space<vmem>>, %arg4: memref<128x32xbf16, #tpu.memory_space<vmem>>, %arg5: memref<128x1xf32, #tpu.memory_space<vmem>>, %arg6: memref<128x128xbf16, #tpu.memory_space<vmem>>, %arg7: memref<128x1xf32, #tpu.memory_space<vmem>>, %arg8: memref<80x128xbf16, #tpu.memory_space<vmem>>, %arg9: memref<80x1xf32, #tpu.memory_space<vmem>>, %arg10: memref<1x32x256xf32, #tpu.memory_space<vmem>>, %arg11: memref<1x1x256xf32, #tpu.memory_space<vmem>>) attributes {dimension_semantics = [#tpu.dimension_semantics<parallel>, #tpu.dimension_semantics<parallel>], iteration_bounds = array<i64: 1, 2>, scalar_prefetch = 0 : i64, scratch_operands = 0 : i64, tpu.core_type = #tpu.core_type<tc>, window_params = [{transform_indices = @transform_0, window_bounds = array<i64: 1, 32, 256>}, {transform_indices = @transform_1, window_bounds = array<i64: 64, 256>}, {pipeline_mode = #tpu.pipeline_mode<synchronous>, transform_indices = @transform_2, window_bounds = array<i64: 128, 32>}, {pipeline_mode = #tpu.pipeline_mode<synchronous>, transform_indices = @transform_3, window_bounds = array<i64: 128, 1>}, {pipeline_mode = #tpu.pipeline_mode<synchronous>, transform_indices = @transform_4, window_bounds = array<i64: 128, 128>}, {pipeline_mode = #tpu.pipeline_mode<synchronous>, transform_indices = @transform_5, window_bounds = array<i64: 128, 1>}, {pipeline_mode = #tpu.pipeline_mode<synchronous>, transform_indices = @transform_6, window_bounds = array<i64: 80, 128>}, {pipeline_mode = #tpu.pipeline_mode<synchronous>, transform_indices = @transform_7, window_bounds = array<i64: 80, 1>}, {transform_indices = @transform_8, window_bounds = array<i64: 1, 32, 256>}, {transform_indices = @transform_9, window_bounds = array<i64: 1, 1, 256>}]} {
    %c0 = arith.constant 0 : index
    %c0_0 = arith.constant 0 : index
    %c0_1 = arith.constant 0 : index
    %0 = vector.load %arg2[%c0, %c0_0, %c0_1] : memref<1x32x256xf32, #tpu.memory_space<vmem>>, vector<1x32x256xf32>
    %1 = vector.shape_cast %0 : vector<1x32x256xf32> to vector<32x256xf32>
    %2 = arith.truncf %1 : vector<32x256xf32> to vector<32x256xbf16>
    %c0_2 = arith.constant 0 : index
    %c0_3 = arith.constant 0 : index
    %3 = vector.load %arg4[%c0_2, %c0_3] : memref<128x32xbf16, #tpu.memory_space<vmem>>, vector<128x32xbf16>
    %cst = arith.constant dense<0.000000e+00> : vector<128x256xf32>
    %4 = tpu.matmul %3, %2, %cst {dimension_numbers = #tpu.dot_dimension_numbers<[1], [0], [0], [1], [0, 0, 1, 1], [], []>} : vector<128x32xbf16>, vector<32x256xbf16>, vector<128x256xf32> -> vector<128x256xf32>
    %c0_4 = arith.constant 0 : index
    %c0_5 = arith.constant 0 : index
    %5 = vector.load %arg5[%c0_4, %c0_5] : memref<128x1xf32, #tpu.memory_space<vmem>>, vector<128x1xf32>
    %6 = vector.broadcast %5 : vector<128x1xf32> to vector<128x256xf32>
    %7 = arith.addf %4, %6 : vector<128x256xf32>
    %8 = vector.extract_strided_slice %7 {offsets = [0, 0], sizes = [64, 256], strides = [1, 1]} : vector<128x256xf32> to vector<64x256xf32>
    %c0_6 = arith.constant 0 : index
    %c0_7 = arith.constant 0 : index
    %9 = vector.load %arg3[%c0_6, %c0_7] : memref<64x256xf32, #tpu.memory_space<vmem>>, vector<64x256xf32>
    %10 = arith.addf %8, %9 : vector<64x256xf32>
    %11 = vector.extract_strided_slice %7 {offsets = [64, 0], sizes = [64, 256], strides = [1, 1]} : vector<128x256xf32> to vector<64x256xf32>
    %12 = tpu.concatenate %10, %11 in 0 : vector<64x256xf32>, vector<64x256xf32> -> vector<128x256xf32>
    %cst_8 = arith.constant 0.000000e+00 : f32
    %13 = vector.broadcast %cst_8 : f32 to vector<128x256xf32>
    %14 = arith.maximumf %12, %13 : vector<128x256xf32>
    %15 = arith.truncf %14 : vector<128x256xf32> to vector<128x256xbf16>
    %c0_9 = arith.constant 0 : index
    %c0_10 = arith.constant 0 : index
    %16 = vector.load %arg6[%c0_9, %c0_10] : memref<128x128xbf16, #tpu.memory_space<vmem>>, vector<128x128xbf16>
    %cst_11 = arith.constant dense<0.000000e+00> : vector<128x256xf32>
    %17 = tpu.matmul %16, %15, %cst_11 {dimension_numbers = #tpu.dot_dimension_numbers<[1], [0], [0], [1], [0, 0, 1, 1], [], []>} : vector<128x128xbf16>, vector<128x256xbf16>, vector<128x256xf32> -> vector<128x256xf32>
    %c0_12 = arith.constant 0 : index
    %c0_13 = arith.constant 0 : index
    %18 = vector.load %arg7[%c0_12, %c0_13] : memref<128x1xf32, #tpu.memory_space<vmem>>, vector<128x1xf32>
    %19 = vector.broadcast %18 : vector<128x1xf32> to vector<128x256xf32>
    %20 = arith.addf %17, %19 : vector<128x256xf32>
    %cst_14 = arith.constant 0.000000e+00 : f32
    %21 = vector.broadcast %cst_14 : f32 to vector<128x256xf32>
    %22 = arith.maximumf %20, %21 : vector<128x256xf32>
    %23 = arith.truncf %22 : vector<128x256xf32> to vector<128x256xbf16>
    %c0_15 = arith.constant 0 : index
    %c0_16 = arith.constant 0 : index
    %24 = vector.load %arg8[%c0_15, %c0_16] : memref<80x128xbf16, #tpu.memory_space<vmem>>, vector<80x128xbf16>
    %cst_17 = arith.constant dense<0.000000e+00> : vector<80x256xf32>
    %25 = tpu.matmul %24, %23, %cst_17 {dimension_numbers = #tpu.dot_dimension_numbers<[1], [0], [0], [1], [0, 0, 1, 1], [], []>} : vector<80x128xbf16>, vector<128x256xbf16>, vector<80x256xf32> -> vector<80x256xf32>
    %c0_18 = arith.constant 0 : index
    %c0_19 = arith.constant 0 : index
    %26 = vector.load %arg9[%c0_18, %c0_19] : memref<80x1xf32, #tpu.memory_space<vmem>>, vector<80x1xf32>
    %27 = vector.broadcast %26 : vector<80x1xf32> to vector<80x256xf32>
    %28 = arith.addf %25, %27 : vector<80x256xf32>
    %29 = vector.extract_strided_slice %28 {offsets = [0, 0], sizes = [32, 256], strides = [1, 1]} : vector<80x256xf32> to vector<32x256xf32>
    %30 = vector.extract_strided_slice %28 {offsets = [32, 0], sizes = [32, 256], strides = [1, 1]} : vector<80x256xf32> to vector<32x256xf32>
    %31 = math.tanh %30 : vector<32x256xf32>
    %32 = arith.mulf %29, %29 : vector<32x256xf32>
    %cst_20 = arith.constant dense<0.000000e+00> : vector<256xf32>
    %33 = vector.multi_reduction <add>, %32, %cst_20 [0] : vector<32x256xf32> to vector<256xf32>
    %34 = vector.shape_cast %33 : vector<256xf32> to vector<1x256xf32>
    %35 = math.rsqrt %34 : vector<1x256xf32>
    %36 = vector.extract_strided_slice %28 {offsets = [64, 0], sizes = [16, 256], strides = [1, 1]} : vector<80x256xf32> to vector<16x256xf32>
    %37 = vector.broadcast %35 : vector<1x256xf32> to vector<16x256xf32>
    %38 = arith.mulf %36, %37 : vector<16x256xf32>
    %cst_21 = arith.constant dense<0xFF800000> : vector<256xf32>
    %39 = vector.multi_reduction <maximumf>, %38, %cst_21 [0] : vector<16x256xf32> to vector<256xf32>
    %40 = vector.shape_cast %39 : vector<256xf32> to vector<1x256xf32>
    %41 = vector.broadcast %40 : vector<1x256xf32> to vector<16x256xf32>
    %42 = arith.subf %38, %41 : vector<16x256xf32>
    %43 = math.exp %42 : vector<16x256xf32>
    %44 = vector.extract_strided_slice %43 {offsets = [8, 0], sizes = [8, 256], strides = [1, 1]} : vector<16x256xf32> to vector<8x256xf32>
    %cst_22 = arith.constant dense<0.000000e+00> : vector<256xf32>
    %45 = vector.multi_reduction <add>, %44, %cst_22 [0] : vector<8x256xf32> to vector<256xf32>
    %46 = vector.shape_cast %45 : vector<256xf32> to vector<1x256xf32>
    %cst_23 = arith.constant dense<0.000000e+00> : vector<256xf32>
    %47 = vector.multi_reduction <add>, %43, %cst_23 [0] : vector<16x256xf32> to vector<256xf32>
    %48 = vector.shape_cast %47 : vector<256xf32> to vector<1x256xf32>
    %49 = arith.divf %46, %48 : vector<1x256xf32>
    %50 = arith.mulf %31, %1 : vector<32x256xf32>
    %51 = vector.broadcast %49 : vector<1x256xf32> to vector<32x256xf32>
    %52 = arith.mulf %51, %50 : vector<32x256xf32>
    %c0_24 = arith.constant 0 : index
    %c0_25 = arith.constant 0 : index
    %c0_26 = arith.constant 0 : index
    %53 = vector.load %arg10[%c0_24, %c0_25, %c0_26] : memref<1x32x256xf32, #tpu.memory_space<vmem>>, vector<1x32x256xf32>
    %54 = vector.shape_cast %53 : vector<1x32x256xf32> to vector<32x256xf32>
    %55 = vector.shape_cast %52 : vector<32x256xf32> to vector<1x32x256xf32>
    tpu.vector_store %arg10[%c0_24, %c0_25, %c0_26], %55 {strides = array<i32>} : memref<1x32x256xf32, #tpu.memory_space<vmem>>, vector<1x32x256xf32>,
    %c0_27 = arith.constant 0 : index
    %c0_28 = arith.constant 0 : index
    %c0_29 = arith.constant 0 : index
    %56 = vector.load %arg11[%c0_27, %c0_28, %c0_29] : memref<1x1x256xf32, #tpu.memory_space<vmem>>, vector<1x1x256xf32>
    %57 = vector.shape_cast %56 : vector<1x1x256xf32> to vector<1x256xf32>
    %58 = vector.shape_cast %49 : vector<1x256xf32> to vector<1x1x256xf32>
    tpu.vector_store %arg11[%c0_27, %c0_28, %c0_29], %58 {strides = array<i32>} : memref<1x1x256xf32, #tpu.memory_space<vmem>>, vector<1x1x256xf32>,
    return
  }
  func.func @transform_0(%arg0: i32, %arg1: i32) -> (i32, i32, i32) {
    %c0_i32 = arith.constant 0 : i32
    %c0_i32_0 = arith.constant 0 : i32
    return %arg1, %c0_i32, %arg0 : i32, i32, i32
  }
  func.func @transform_1(%arg0: i32, %arg1: i32) -> (i32, i32) {
    %c0_i32 = arith.constant 0 : i32
    %c0_i32_0 = arith.constant 0 : i32
    return %c0_i32, %arg0 : i32, i32
  }
  func.func @transform_2(%arg0: i32, %arg1: i32) -> (i32, i32) {
    %c0_i32 = arith.constant 0 : i32
    %c0_i32_0 = arith.constant 0 : i32
    %c0_i32_1 = arith.constant 0 : i32
    return %c0_i32, %c0_i32_0 : i32, i32
  }
  func.func @transform_3(%arg0: i32, %arg1: i32) -> (i32, i32) {
    %c0_i32 = arith.constant 0 : i32
    %c0_i32_0 = arith.constant 0 : i32
    %c0_i32_1 = arith.constant 0 : i32
    return %c0_i32, %c0_i32_0 : i32, i32
  }
  func.func @transform_4(%arg0: i32, %arg1: i32) -> (i32, i32) {
    %c0_i32 = arith.constant 0 : i32
    %c0_i32_0 = arith.constant 0 : i32
    %c0_i32_1 = arith.constant 0 : i32
    return %c0_i32, %c0_i32_0 : i32, i32
  }
  func.func @transform_5(%arg0: i32, %arg1: i32) -> (i32, i32) {
    %c0_i32 = arith.constant 0 : i32
    %c0_i32_0 = arith.constant 0 : i32
    %c0_i32_1 = arith.constant 0 : i32
    return %c0_i32, %c0_i32_0 : i32, i32
  }
  func.func @transform_6(%arg0: i32, %arg1: i32) -> (i32, i32) {
    %c0_i32 = arith.constant 0 : i32
    %c0_i32_0 = arith.constant 0 : i32
    %c0_i32_1 = arith.constant 0 : i32
    return %c0_i32, %c0_i32_0 : i32, i32
  }
  func.func @transform_7(%arg0: i32, %arg1: i32) -> (i32, i32) {
    %c0_i32 = arith.constant 0 : i32
    %c0_i32_0 = arith.constant 0 : i32
    %c0_i32_1 = arith.constant 0 : i32
    return %c0_i32, %c0_i32_0 : i32, i32
  }
  func.func @transform_8(%arg0: i32, %arg1: i32) -> (i32, i32, i32) {
    %c0_i32 = arith.constant 0 : i32
    %c0_i32_0 = arith.constant 0 : i32
    return %arg1, %c0_i32, %arg0 : i32, i32, i32
  }
  func.func @transform_9(%arg0: i32, %arg1: i32) -> (i32, i32, i32) {
    %c0_i32 = arith.constant 0 : i32
    %c0_i32_0 = arith.constant 0 : i32
    return %arg1, %c0_i32, %arg0 : i32, i32, i32
  }
}

</mosaic_0001>

<llo_original>
// kernel: tpu_custom_call.1
$region0: #{tpu_custom_call.1}
  #allocation0 [shape = 'u32[]', space=smem, size = 0x4, offset = 0x4, fixed_abs, tag = 'smem constant byte address 0x4 - core index']
  #allocation1 [shape = 'u32[144,128]{1,0:T(1,128)}', space=vmem, size = 0x12000, scoped, tag = 'internal scratch']
  %s0 = inlined_call_operand.vmem [shape: f32[2,32,256], index: 0, kind: input, shape index: {}]
  %s1 = inlined_call_operand.vmem [shape: f32[64,256], index: 1, kind: input, shape index: {}]
  %s2 = inlined_call_operand.vmem [shape: bf16[128,32], index: 2, kind: input, shape index: {}]
  %s3 = inlined_call_operand.vmem [shape: f32[128,1], index: 3, kind: input, shape index: {}]
  %s4 = inlined_call_operand.vmem [shape: bf16[128,128], index: 4, kind: input, shape index: {}]
  %s5 = inlined_call_operand.vmem [shape: f32[128,1], index: 5, kind: input, shape index: {}]
  %s6 = inlined_call_operand.vmem [shape: bf16[80,128], index: 6, kind: input, shape index: {}]
  %s7 = inlined_call_operand.vmem [shape: f32[80,1], index: 7, kind: input, shape index: {}]
  %s8 = inlined_call_operand.hbm [shape: f32[2,32,256], index: 8, kind: output, shape index: {0}]
  %s9 = inlined_call_operand.hbm [shape: f32[2,1,256], index: 9, kind: output, shape index: {1}]
  %10 = xla_tuple %s8, %s9
  %s11 = sld [smem:[#allocation0]]
  $region73: #{tpu_custom_call.1} parent=0
    _
  %s13 = ssub.s32 1, %s11
  %s14 = scalar_select 0, %s13, %s11
  $region1: #{tpu_custom_call.1} parent=0
    #allocation2 [shape = 'u8[65536]{0}', space=vmem, size = 0x10000, scoped, tag = 'output window, operand 0']
    #allocation3 [shape = 's32[2]{0}', space=sflag, size = 0x8, scoped, tag = 'scoped memory for tpu_custom_call.1']
    #allocation4 [shape = 'u8[2048]{0}', space=vmem, size = 0x800, scoped, tag = 'output window, operand 1']
    #allocation5 [shape = 's32[2]{0}', space=sflag, size = 0x8, scoped, tag = 'scoped memory for tpu_custom_call.1']
    %15 = vsyncpa [#allocation3], 0
    %s16 = scalar_lea.sflag [#allocation3], 1
    %17 = vsyncpa %s16, 0
    %18 = vsyncpa [#allocation5], 0
    %s19 = scalar_lea.sflag [#allocation5], 1
    %20 = vsyncpa %s19, 0
    loop: start=0, step=1, limit=4
    $region2: #{tpu_custom_call.1} parent=1 // loop_pre_header
      _
    $region3: #{tpu_custom_call.1} parent=1 // loop_header
      %s22 = sphi 0, %s26
      %p23 = scmp.ge.s32.totalorder %s22, 4
      %s29 = sphi 0, %s41
      %s30 = sphi 0, %s37
      %s31 = sphi 0, %s29
      %s32 = sphi 0, %s30
      %s33 = sphi 0, %s31
      %s34 = sphi 0, %s32
      %s46 = sphi 0, %s48
      %s49 = sphi 0, %s46
      %s50 = sphi 0, %s49
      %s66 = sphi 0, %s50
      %s72 = sphi 0, %s74
      %s75 = sphi 0, %s72
      %s76 = sphi 0, %s75
      %s92 = sphi 0, %s76
      %s96 = sphi 0, %s96
      %s98 = sphi 0, %s96
      %s99 = sphi 0, %s98
      %s113 = sphi 0, %s99
      %s117 = sphi 0, %s117
      %s119 = sphi 0, %s117
      %s120 = sphi 0, %s119
      %s134 = sphi 0, %s120
      %s138 = sphi 0, %s138
      %s140 = sphi 0, %s138
      %s141 = sphi 0, %s140
      %s155 = sphi 0, %s141
      %s159 = sphi 0, %s159
      %s161 = sphi 0, %s159
      %s162 = sphi 0, %s161
      %s176 = sphi 0, %s162
      %s180 = sphi 0, %s180
      %s182 = sphi 0, %s180
      %s183 = sphi 0, %s182
      %s197 = sphi 0, %s183
      %s201 = sphi 0, %s201
      %s203 = sphi 0, %s201
      %s204 = sphi 0, %s203
      %s218 = sphi 0, %s204
      %s226 = sphi 0, %s228
      %s229 = sphi 0, %s226
      %s230 = sphi 0, %s229
      %s246 = sphi 0, %s230
      %s254 = sphi 0, %s256
      %s257 = sphi 0, %s254
      %s258 = sphi 0, %s257
      %s274 = sphi 0, %s258
    $region4: #{tpu_custom_call.1} parent=1 // loop_header_branch
      %25 = sbr.rel (%p23) target = $region8
    $region5: #{tpu_custom_call.1} parent=1 // loop_body
      %s27 = ssub.s32 %s22, 1
      %s28 = ssub.s32 %s22, 2
      %s35 = sadd.s32 1, %s30
      %p36 = scmp.ge.s32.totalorder %s35, 2
      %s37 = scalar_select %p36, 0, %s35
      %s38 = sadd.s32 1, %s29
      %s39 = scalar_select %p36, %s38, %s29
      %p40 = scmp.ge.s32.totalorder %s39, 1
      %s41 = scalar_select %p40, 0, %s39
      %s42 = ssub.s32 %s30, %s37
      %s43 = ssub.s32 %s29, %s41
      %s44 = sor.u32 %s42, %s43
      %p45 = scmp.eq.s32.totalorder %s44, 0
      %s47 = sadd.s32 %s46, 1
      %s48 = scalar_select %p45, %s46, %s47
      %p51 = pneg %p45
      %p52 = scmp.eq.s32.totalorder %s22, 1
      %p53 = por %p51, %p52
      %p54 = scmp.ne.s32.totalorder %s46, %s49
      %p55 = scmp.eq.s32.totalorder %s22, 0
      %p56 = por %p54, %p55
      %p57 = scmp.ne.s32.totalorder %s46, %s49
      %p58 = scmp.eq.s32.totalorder %s27, 1
      %p59 = por %p57, %p58
      %p60 = scmp.ne.s32.totalorder %s49, %s50
      %p61 = scmp.eq.s32.totalorder %s27, 0
      %p62 = por %p60, %p61
      %p63 = scmp.ne.s32.totalorder %s49, %s50
      %p64 = scmp.eq.s32.totalorder %s28, 1
      %p65 = por %p63, %p64
      %p67 = scmp.ne.s32.totalorder %s50, %s66
      %p68 = scmp.eq.s32.totalorder %s28, 0
      %p69 = por %p67, %p68
      %s70 = ssub.s32 %s29, %s41
      %p71 = scmp.eq.s32.totalorder %s70, 0
      %s73 = sadd.s32 %s72, 1
      %s74 = scalar_select %p71, %s72, %s73
      %p77 = pneg %p71
      %p78 = scmp.eq.s32.totalorder %s22, 1
      %p79 = por %p77, %p78
      %p80 = scmp.ne.s32.totalorder %s72, %s75
      %p81 = scmp.eq.s32.totalorder %s22, 0
      %p82 = por %p80, %p81
      %p83 = scmp.ne.s32.totalorder %s72, %s75
      %p84 = scmp.eq.s32.totalorder %s27, 1
      %p85 = por %p83, %p84
      %p86 = scmp.ne.s32.totalorder %s75, %s76
      %p87 = scmp.eq.s32.totalorder %s27, 0
      %p88 = por %p86, %p87
      %p89 = scmp.ne.s32.totalorder %s75, %s76
      %p90 = scmp.eq.s32.totalorder %s28, 1
      %p91 = por %p89, %p90
      %p93 = scmp.ne.s32.totalorder %s76, %s92
      %p94 = scmp.eq.s32.totalorder %s28, 0
      %p95 = por %p93, %p94
      %s97 = sadd.s32 %s96, 1
      %p100 = scmp.eq.s32.totalorder %s22, 1
      %p101 = scmp.ne.s32.totalorder %s96, %s98
      %p102 = scmp.eq.s32.totalorder %s22, 0
      %p103 = por %p101, %p102
      %p104 = scmp.ne.s32.totalorder %s96, %s98
      %p105 = scmp.eq.s32.totalorder %s27, 1
      %p106 = por %p104, %p105
      %p107 = scmp.ne.s32.totalorder %s98, %s99
      %p108 = scmp.eq.s32.totalorder %s27, 0
      %p109 = por %p107, %p108
      %p110 = scmp.ne.s32.totalorder %s98, %s99
      %p111 = scmp.eq.s32.totalorder %s28, 1
      %p112 = por %p110, %p111
      %p114 = scmp.ne.s32.totalorder %s99, %s113
      %p115 = scmp.eq.s32.totalorder %s28, 0
      %p116 = por %p114, %p115
      %s118 = sadd.s32 %s117, 1
      %p121 = scmp.eq.s32.totalorder %s22, 1
      %p122 = scmp.ne.s32.totalorder %s117, %s119
      %p123 = scmp.eq.s32.totalorder %s22, 0
      %p124 = por %p122, %p123
      %p125 = scmp.ne.s32.totalorder %s117, %s119
      %p126 = scmp.eq.s32.totalorder %s27, 1
      %p127 = por %p125, %p126
      %p128 = scmp.ne.s32.totalorder %s119, %s120
      %p129 = scmp.eq.s32.totalorder %s27, 0
      %p130 = por %p128, %p129
      %p131 = scmp.ne.s32.totalorder %s119, %s120
      %p132 = scmp.eq.s32.totalorder %s28, 1
      %p133 = por %p131, %p132
      %p135 = scmp.ne.s32.totalorder %s120, %s134
      %p136 = scmp.eq.s32.totalorder %s28, 0
      %p137 = por %p135, %p136
      %s139 = sadd.s32 %s138, 1
      %p142 = scmp.eq.s32.totalorder %s22, 1
      %p143 = scmp.ne.s32.totalorder %s138, %s140
      %p144 = scmp.eq.s32.totalorder %s22, 0
      %p145 = por %p143, %p144
      %p146 = scmp.ne.s32.totalorder %s138, %s140
      %p147 = scmp.eq.s32.totalorder %s27, 1
      %p148 = por %p146, %p147
      %p149 = scmp.ne.s32.totalorder %s140, %s141
      %p150 = scmp.eq.s32.totalorder %s27, 0
      %p151 = por %p149, %p150
      %p152 = scmp.ne.s32.totalorder %s140, %s141
      %p153 = scmp.eq.s32.totalorder %s28, 1
      %p154 = por %p152, %p153
      %p156 = scmp.ne.s32.totalorder %s141, %s155
      %p157 = scmp.eq.s32.totalorder %s28, 0
      %p158 = por %p156, %p157
      %s160 = sadd.s32 %s159, 1
      %p163 = scmp.eq.s32.totalorder %s22, 1
      %p164 = scmp.ne.s32.totalorder %s159, %s161
      %p165 = scmp.eq.s32.totalorder %s22, 0
      %p166 = por %p164, %p165
      %p167 = scmp.ne.s32.totalorder %s159, %s161
      %p168 = scmp.eq.s32.totalorder %s27, 1
      %p169 = por %p167, %p168
      %p170 = scmp.ne.s32.totalorder %s161, %s162
      %p171 = scmp.eq.s32.totalorder %s27, 0
      %p172 = por %p170, %p171
      %p173 = scmp.ne.s32.totalorder %s161, %s162
      %p174 = scmp.eq.s32.totalorder %s28, 1
      %p175 = por %p173, %p174
      %p177 = scmp.ne.s32.totalorder %s162, %s176
      %p178 = scmp.eq.s32.totalorder %s28, 0
      %p179 = por %p177, %p178
      %s181 = sadd.s32 %s180, 1
      %p184 = scmp.eq.s32.totalorder %s22, 1
      %p185 = scmp.ne.s32.totalorder %s180, %s182
      %p186 = scmp.eq.s32.totalorder %s22, 0
      %p187 = por %p185, %p186
      %p188 = scmp.ne.s32.totalorder %s180, %s182
      %p189 = scmp.eq.s32.totalorder %s27, 1
      %p190 = por %p188, %p189
      %p191 = scmp.ne.s32.totalorder %s182, %s183
      %p192 = scmp.eq.s32.totalorder %s27, 0
      %p193 = por %p191, %p192
      %p194 = scmp.ne.s32.totalorder %s182, %s183
      %p195 = scmp.eq.s32.totalorder %s28, 1
      %p196 = por %p194, %p195
      %p198 = scmp.ne.s32.totalorder %s183, %s197
      %p199 = scmp.eq.s32.totalorder %s28, 0
      %p200 = por %p198, %p199
      %s202 = sadd.s32 %s201, 1
      %p205 = scmp.eq.s32.totalorder %s22, 1
      %p206 = scmp.ne.s32.totalorder %s201, %s203
      %p207 = scmp.eq.s32.totalorder %s22, 0
      %p208 = por %p206, %p207
      %p209 = scmp.ne.s32.totalorder %s201, %s203
      %p210 = scmp.eq.s32.totalorder %s27, 1
      %p211 = por %p209, %p210
      %p212 = scmp.ne.s32.totalorder %s203, %s204
      %p213 = scmp.eq.s32.totalorder %s27, 0
      %p214 = por %p212, %p213
      %p215 = scmp.ne.s32.totalorder %s203, %s204
      %p216 = scmp.eq.s32.totalorder %s28, 1
      %p217 = por %p215, %p216
      %p219 = scmp.ne.s32.totalorder %s204, %s218
      %p220 = scmp.eq.s32.totalorder %s28, 0
      %p221 = por %p219, %p220
      %s222 = ssub.s32 %s30, %s37
      %s223 = ssub.s32 %s29, %s41
      %s224 = sor.u32 %s222, %s223
      %p225 = scmp.eq.s32.totalorder %s224, 0
      %s227 = sadd.s32 %s226, 1
      %s228 = scalar_select %p225, %s226, %s227
      %p231 = pneg %p225
      %p232 = scmp.eq.s32.totalorder %s22, 1
      %p233 = por %p231, %p232
      %p234 = scmp.ne.s32.totalorder %s226, %s229
      %p235 = scmp.eq.s32.totalorder %s22, 0
      %p236 = por %p234, %p235
      %p237 = scmp.ne.s32.totalorder %s226, %s229
      %p238 = scmp.eq.s32.totalorder %s27, 1
      %p239 = por %p237, %p238
      %p240 = scmp.ne.s32.totalorder %s229, %s230
      %p241 = scmp.eq.s32.totalorder %s27, 0
      %p242 = por %p240, %p241
      %p243 = scmp.ne.s32.totalorder %s229, %s230
      %p244 = scmp.eq.s32.totalorder %s28, 1
      %p245 = por %p243, %p244
      %p247 = scmp.ne.s32.totalorder %s230, %s246
      %p248 = scmp.eq.s32.totalorder %s28, 0
      %p249 = por %p247, %p248
      %s250 = ssub.s32 %s30, %s37
      %s251 = ssub.s32 %s29, %s41
      %s252 = sor.u32 %s250, %s251
      %p253 = scmp.eq.s32.totalorder %s252, 0
      %s255 = sadd.s32 %s254, 1
      %s256 = scalar_select %p253, %s254, %s255
      %p259 = pneg %p253
      %p260 = scmp.eq.s32.totalorder %s22, 1
      %p261 = por %p259, %p260
      %p262 = scmp.ne.s32.totalorder %s254, %s257
      %p263 = scmp.eq.s32.totalorder %s22, 0
      %p264 = por %p262, %p263
      %p265 = scmp.ne.s32.totalorder %s254, %s257
      %p266 = scmp.eq.s32.totalorder %s27, 1
      %p267 = por %p265, %p266
      %p268 = scmp.ne.s32.totalorder %s257, %s258
      %p269 = scmp.eq.s32.totalorder %s27, 0
      %p270 = por %p268, %p269
      %p271 = scmp.ne.s32.totalorder %s257, %s258
      %p272 = scmp.eq.s32.totalorder %s28, 1
      %p273 = por %p271, %p272
      %p275 = scmp.ne.s32.totalorder %s258, %s274
      %p276 = scmp.eq.s32.totalorder %s28, 0
      %p277 = por %p275, %p276
      %p278 = scmp.le.s32.totalorder 1, %s22
      %p279 = scmp.lt.s32.totalorder %s22, 3
      %p280 = pnand %p278, %p279
      %p281 = pneg %p280
      // Predicated region
      $region9: #{tpu_custom_call.1} parent=5 // pred_check
        _
      $region10: #{tpu_custom_call.1} parent=5 // pred_check_branch
        %283 = sbr.rel (%p280) target = $region12
      $region11: #{tpu_custom_call.1} parent=5 // pred_region
        %s284 = ssub.s32 %s22, 1
        // Predicated region
        $region13: #{tpu_custom_call.1} parent=11 // pred_check
          %p285 = pneg %p88
        $region14: #{tpu_custom_call.1} parent=11 // pred_check_branch
          %287 = sbr.rel (%p285) target = $region16
        $region15: #{tpu_custom_call.1} parent=11 // pred_region
          %s288 = smul.u32 2, %s31
          %p289 = scmp.lt.s32.totalorder %s288, 1
          %s290 = scalar_select %p289, %s288, 1
          %s291 = smul.addr %s290, 8
          %s292 = scalar_lea.vmem %s1, %s291
          %s293 = smul.u32 2, %s31
        $region16: #{tpu_custom_call.1} parent=11 // pred_fallthru
          _
        // Predicated region
        $region17: #{tpu_custom_call.1} parent=11 // pred_check
          %p294 = pneg %p109
        $region18: #{tpu_custom_call.1} parent=11 // pred_check_branch
          %296 = sbr.rel (%p294) target = $region20
        $region19: #{tpu_custom_call.1} parent=11 // pred_region
          _
        $region20: #{tpu_custom_call.1} parent=11 // pred_fallthru
          _
        // Predicated region
        $region21: #{tpu_custom_call.1} parent=11 // pred_check
          %p297 = pneg %p130
        $region22: #{tpu_custom_call.1} parent=11 // pred_check_branch
          %299 = sbr.rel (%p297) target = $region24
        $region23: #{tpu_custom_call.1} parent=11 // pred_region
          _
        $region24: #{tpu_custom_call.1} parent=11 // pred_fallthru
          _
        // Predicated region
        $region25: #{tpu_custom_call.1} parent=11 // pred_check
          %p300 = pneg %p151
        $region26: #{tpu_custom_call.1} parent=11 // pred_check_branch
          %302 = sbr.rel (%p300) target = $region28
        $region27: #{tpu_custom_call.1} parent=11 // pred_region
          _
        $region28: #{tpu_custom_call.1} parent=11 // pred_fallthru
          _
        // Predicated region
        $region29: #{tpu_custom_call.1} parent=11 // pred_check
          %p303 = pneg %p172
        $region30: #{tpu_custom_call.1} parent=11 // pred_check_branch
          %305 = sbr.rel (%p303) target = $region32
        $region31: #{tpu_custom_call.1} parent=11 // pred_region
          _
        $region32: #{tpu_custom_call.1} parent=11 // pred_fallthru
          _
        // Predicated region
        $region33: #{tpu_custom_call.1} parent=11 // pred_check
          %p306 = pneg %p193
        $region34: #{tpu_custom_call.1} parent=11 // pred_check_branch
          %308 = sbr.rel (%p306) target = $region36
        $region35: #{tpu_custom_call.1} parent=11 // pred_region
          _
        $region36: #{tpu_custom_call.1} parent=11 // pred_fallthru
          _
        // Predicated region
        $region37: #{tpu_custom_call.1} parent=11 // pred_check
          %p309 = pneg %p214
        $region38: #{tpu_custom_call.1} parent=11 // pred_check_branch
          %311 = sbr.rel (%p309) target = $region40
        $region39: #{tpu_custom_call.1} parent=11 // pred_region
          _
        $region40: #{tpu_custom_call.1} parent=11 // pred_fallthru
          _
      $region12: #{tpu_custom_call.1} parent=5 // pred_fallthru
        _
      %p312 = scmp.lt.s32.totalorder %s22, 2
      // Predicated region
      $region41: #{tpu_custom_call.1} parent=5 // pred_check
        %p313 = pneg %p312
      $region42: #{tpu_custom_call.1} parent=5 // pred_check_branch
        %315 = sbr.rel (%p313) target = $region44
      $region43: #{tpu_custom_call.1} parent=5 // pred_region
        // Predicated region
        $region45: #{tpu_custom_call.1} parent=43 // pred_check
          %p316 = pneg %p56
        $region46: #{tpu_custom_call.1} parent=43 // pred_check_branch
          %318 = sbr.rel (%p316) target = $region48
        $region47: #{tpu_custom_call.1} parent=43 // pred_region
          %s319 = smul.u32 2, %s29
          %p320 = scmp.lt.s32.totalorder %s30, 1
          %s321 = scalar_select %p320, %s30, 1
          %p322 = scmp.lt.s32.totalorder %s319, 1
          %s323 = scalar_select %p322, %s319, 1
          %s324 = smul.addr %s321, 8
          %s325 = sadd.s32 %s323, %s324
          %s326 = smul.addr %s325, 8
          %s327 = scalar_lea.vmem %s0, %s326
          %s328 = smul.u32 2, %s29
        $region48: #{tpu_custom_call.1} parent=43 // pred_fallthru
          _
      $region44: #{tpu_custom_call.1} parent=5 // pred_fallthru
        _
      %p329 = scmp.le.s32.totalorder 1, %s22
      %p330 = scmp.lt.s32.totalorder %s22, 3
      %p331 = pnand %p329, %p330
      %p332 = pneg %p331
      // Predicated region
      $region49: #{tpu_custom_call.1} parent=5 // pred_check
        _
      $region50: #{tpu_custom_call.1} parent=5 // pred_check_branch
        %334 = sbr.rel (%p331) target = $region52
      $region51: #{tpu_custom_call.1} parent=5 // pred_region
        %s335 = ssub.s32 %s22, 1
        %s336 = smul.u32 2, %s31
        %p337 = scmp.lt.s32.totalorder %s32, 1
        %s338 = scalar_select %p337, %s32, 1
        %p339 = scmp.lt.s32.totalorder %s336, 1
        %s340 = scalar_select %p339, %s336, 1
        %s341 = smul.addr %s338, 8
        %s342 = sadd.s32 %s340, %s341
        %s343 = smul.addr %s342, 8
        %s344 = scalar_lea.vmem %s0, %s343
        %p345 = pneg %p62
        %p346 = pneg %p59
        %s347 = smul.u32 2, %s31
        %p348 = scmp.lt.s32.totalorder %s347, 1
        %s349 = scalar_select %p348, %s347, 1
        %s350 = smul.addr %s349, 8
        %s351 = scalar_lea.vmem %s1, %s350
        %p352 = pneg %p88
        %p353 = pneg %p85
        %p354 = pneg %p109
        %p355 = pneg %p106
        %p356 = pneg %p130
        %p357 = pneg %p127
        %p358 = pneg %p151
        %p359 = pneg %p148
        %p360 = pneg %p172
        %p361 = pneg %p169
        %p362 = pneg %p193
        %p363 = pneg %p190
        %p364 = pneg %p214
        %p365 = pneg %p211
        %p366 = pneg %p242
        %p367 = pneg %p239
        %s368 = sand.u32 %s229, 1
        %s369 = scalar_lea.sflag [#allocation3], %s368
        %s370 = sand.u32 %s229, 1
        %s371 = smul.addr %s370, 64
        %s372 = scalar_lea.vmem [#allocation2], %s371
        %p373 = pneg %p270
        %p374 = pneg %p267
        %s375 = sand.u32 %s257, 1
        %s376 = scalar_lea.sflag [#allocation5], %s375
        %s377 = sand.u32 %s257, 1
        %s378 = smul.addr %s377, 2
        %s379 = scalar_lea.vmem [#allocation4], %s378
        %s380 = smul.u32 2, %s31
        %p381 = scmp.lt.s32.totalorder %s32, 1
        %s382 = scalar_select %p381, %s32, 1
        %p383 = scmp.lt.s32.totalorder %s380, 1
        %s384 = scalar_select %p383, %s380, 1
        %s385 = smul.addr %s382, 8
        %s386 = sadd.s32 %s384, %s385
        %s387 = smul.addr %s386, 8
        %s388 = scalar_lea.vmem %s0, %s387
        %s389 = smul.u32 2, %s31
        %s390 = smul.u32 2, %s31
        %p391 = scmp.lt.s32.totalorder %s390, 1
        %s392 = scalar_select %p391, %s390, 1
        %s393 = smul.addr %s392, 8
        %s394 = scalar_lea.vmem %s1, %s393
        %s395 = smul.u32 2, %s31
        %s396 = smul.u32 2, %s31
        %s397 = smul.u32 2, %s31
        %v399 = vld [vmem:[%s388] sm:$0xff]
        %v400 = vld [vmem:[%s388 + $0x8] sm:$0xff]
        %v401 = vld [vmem:[%s388 + $0x10] sm:$0xff]
        %v402 = vld [vmem:[%s388 + $0x18] sm:$0xff]
        %v403 = vld [vmem:[%s388 + $0x20] sm:$0xff]
        %v404 = vld [vmem:[%s388 + $0x28] sm:$0xff]
        %v405 = vld [vmem:[%s388 + $0x30] sm:$0xff]
        %v406 = vld [vmem:[%s388 + $0x38] sm:$0xff]
        %v407 = vpack.c.bf16 %v401, %v399
        %v408 = vpack.c.bf16 %v402, %v400
        %v409 = vpack.c.bf16 %v405, %v403
        %v410 = vpack.c.bf16 %v406, %v404
        %v411 = vld [vmem:[%s2] sm:$0xf]
        %v412 = vld [vmem:[%s2 + $0x4] sm:$0xf]
        %v413 = vld [vmem:[%s2 + $0x8] sm:$0xf]
        %v414 = vld [vmem:[%s2 + $0xc] sm:$0xf]
        %v415 = vld [vmem:[%s2 + $0x10] sm:$0xf]
        %v416 = vld [vmem:[%s2 + $0x14] sm:$0xf]
        %v417 = vld [vmem:[%s2 + $0x18] sm:$0xf]
        %v418 = vld [vmem:[%s2 + $0x1c] sm:$0xf]
        %v419 = vld [vmem:[%s2 + $0x20] sm:$0xf]
        %v420 = vld [vmem:[%s2 + $0x24] sm:$0xf]
        %v421 = vld [vmem:[%s2 + $0x28] sm:$0xf]
        %v422 = vld [vmem:[%s2 + $0x2c] sm:$0xf]
        %v423 = vld [vmem:[%s2 + $0x30] sm:$0xf]
        %v424 = vld [vmem:[%s2 + $0x34] sm:$0xf]
        %v425 = vld [vmem:[%s2 + $0x38] sm:$0xf]
        %v426 = vld [vmem:[%s2 + $0x3c] sm:$0xf]
        %v427 = vld [vmem:[%s3] sm:$0xff]
        %v428 = vld [vmem:[%s3 + $0x8] sm:$0xff]
        %v429 = vld [vmem:[%s3 + $0x10] sm:$0xff]
        %v430 = vld [vmem:[%s3 + $0x18] sm:$0xff]
        %v431 = vld [vmem:[%s3 + $0x20] sm:$0xff]
        %v432 = vld [vmem:[%s3 + $0x28] sm:$0xff]
        %v433 = vld [vmem:[%s3 + $0x30] sm:$0xff]
        %v434 = vld [vmem:[%s3 + $0x38] sm:$0xff]
        %v435 = vld [vmem:[%s3 + $0x40] sm:$0xff]
        %v436 = vld [vmem:[%s3 + $0x48] sm:$0xff]
        %v437 = vld [vmem:[%s3 + $0x50] sm:$0xff]
        %v438 = vld [vmem:[%s3 + $0x58] sm:$0xff]
        %v439 = vld [vmem:[%s3 + $0x60] sm:$0xff]
        %v440 = vld [vmem:[%s3 + $0x68] sm:$0xff]
        %v441 = vld [vmem:[%s3 + $0x70] sm:$0xff]
        %v442 = vld [vmem:[%s3 + $0x78] sm:$0xff]
        %444 = vset.pattern.permute.xlu0 0
        %445 = vperm.xlu0 %444, %v427
        %v446 = vpop.permute.xlu0 %445
        %449 = vset.pattern.permute.xlu0 0
        %450 = vperm.xlu0 %449, %v428
        %v451 = vpop.permute.xlu0 %450
        %454 = vset.pattern.permute.xlu0 0
        %455 = vperm.xlu0 %454, %v429
        %v456 = vpop.permute.xlu0 %455
        %459 = vset.pattern.permute.xlu0 0
        %460 = vperm.xlu0 %459, %v430
        %v461 = vpop.permute.xlu0 %460
        %464 = vset.pattern.permute.xlu0 0
        %465 = vperm.xlu0 %464, %v431
        %v466 = vpop.permute.xlu0 %465
        %469 = vset.pattern.permute.xlu0 0
        %470 = vperm.xlu0 %469, %v432
        %v471 = vpop.permute.xlu0 %470
        %474 = vset.pattern.permute.xlu0 0
        %475 = vperm.xlu0 %474, %v433
        %v476 = vpop.permute.xlu0 %475
        %479 = vset.pattern.permute.xlu0 0
        %480 = vperm.xlu0 %479, %v434
        %v481 = vpop.permute.xlu0 %480
        %484 = vset.pattern.permute.xlu0 0
        %485 = vperm.xlu0 %484, %v435
        %v486 = vpop.permute.xlu0 %485
        %489 = vset.pattern.permute.xlu0 0
        %490 = vperm.xlu0 %489, %v436
        %v491 = vpop.permute.xlu0 %490
        %494 = vset.pattern.permute.xlu0 0
        %495 = vperm.xlu0 %494, %v437
        %v496 = vpop.permute.xlu0 %495
        %499 = vset.pattern.permute.xlu0 0
        %500 = vperm.xlu0 %499, %v438
        %v501 = vpop.permute.xlu0 %500
        %504 = vset.pattern.permute.xlu0 0
        %505 = vperm.xlu0 %504, %v439
        %v506 = vpop.permute.xlu0 %505
        %509 = vset.pattern.permute.xlu0 0
        %510 = vperm.xlu0 %509, %v440
        %v511 = vpop.permute.xlu0 %510
        %514 = vset.pattern.permute.xlu0 0
        %515 = vperm.xlu0 %514, %v441
        %v516 = vpop.permute.xlu0 %515
        %519 = vset.pattern.permute.xlu0 0
        %520 = vperm.xlu0 %519, %v442
        %v521 = vpop.permute.xlu0 %520
        %v539 = vunpack.c.l.b16 %v411
        %v540 = vunpack.c.l.b16 %v412
        %v541 = vunpack.c.l.b16 %v413
        %v542 = vunpack.c.l.b16 %v414
        %v543 = vunpack.c.l.b16 %v415
        %v544 = vunpack.c.l.b16 %v416
        %v545 = vunpack.c.l.b16 %v417
        %v546 = vunpack.c.l.b16 %v418
        %v547 = vunpack.c.l.b16 %v419
        %v548 = vunpack.c.l.b16 %v420
        %v549 = vunpack.c.l.b16 %v421
        %v550 = vunpack.c.l.b16 %v422
        %v551 = vunpack.c.l.b16 %v423
        %v552 = vunpack.c.l.b16 %v424
        %v553 = vunpack.c.l.b16 %v425
        %v554 = vunpack.c.l.b16 %v426
        %v555 = vpack.c.b16 %v540, %v539
        %v556 = vpack.c.b16 %v542, %v541
        %v557 = vpack.c.b16 %v544, %v543
        %v558 = vpack.c.b16 %v546, %v545
        %v559 = vpack.c.b16 %v548, %v547
        %v560 = vpack.c.b16 %v550, %v549
        %v561 = vpack.c.b16 %v552, %v551
        %v562 = vpack.c.b16 %v554, %v553
        %vm563 = vcmask 261120
        %v565 = vsel %vm563, %v555, 0
        %v568 = vsel %vm563, %v556, 0
        %v571 = vsel %vm563, %v557, 0
        %v574 = vsel %vm563, %v558, 0
        %v577 = vsel %vm563, %v559, 0
        %v580 = vsel %vm563, %v560, 0
        %v583 = vsel %vm563, %v561, 0
        %v586 = vsel %vm563, %v562, 0
        %588 = vmatprep.subr.bf16.mxu0 %v408
        %589 = vmatpush1.bf16.msra.mxu0 %v407
        %590 = vmatprep.subr.bf16.mxu0 %v410
        %591 = vmatpush1.bf16.msra.mxu0 %v409
        %592 = vmatprep.subr.bf16.mxu0 0
        %593 = vmatpush1.bf16.msra.mxu0 0
        %594 = vmatprep.subr.bf16.mxu0 0
        %595 = vmatpush1.bf16.msra.mxu0 0
        %596 = vmatprep.subr.bf16.mxu0 0
        %597 = vmatpush1.bf16.msra.mxu0 0
        %598 = vmatprep.subr.bf16.mxu0 0
        %599 = vmatpush1.bf16.msra.mxu0 0
        %600 = vmatprep.subr.bf16.mxu0 0
        %601 = vmatpush1.bf16.msra.mxu0 0
        %602 = vmatprep.subr.bf16.mxu0 0
        %603 = vmatpush1.bf16.msra.mxu0 0
        %604 = vmatprep.subr.bf16.mxu0 0
        %605 = vmatpush1.bf16.msra.mxu0 0
        %606 = vmatprep.subr.bf16.mxu0 0
        %607 = vmatpush1.bf16.msra.mxu0 0
        %608 = vmatprep.subr.bf16.mxu0 0
        %609 = vmatpush1.bf16.msra.mxu0 0
        %610 = vmatprep.subr.bf16.mxu0 0
        %611 = vmatpush1.bf16.msra.mxu0 0
        %612 = vmatprep.subr.bf16.mxu0 0
        %613 = vmatpush1.bf16.msra.mxu0 0
        %614 = vmatprep.subr.bf16.mxu0 0
        %615 = vmatpush1.bf16.msra.mxu0 0
        %616 = vmatprep.subr.bf16.mxu0 0
        %617 = vmatpush1.bf16.msra.mxu0 0
        %618 = vmatprep.subr.bf16.mxu0 0
        %619 = vmatpush1.bf16.msra.mxu0 0
        %620 = vmatprep.mubr.bf16.mxu0 0
        %621 = vmatmul.mubr.bf16.gmra.mrb[0].mxu0 %v565
        %v622 = vpop.f32.mrb[0].mxu0
        %v623 = vadd.f32 %v446, %v622
        %v624 = vpop.f32.mrb[0].mxu0
        %v625 = vadd.f32 %v446, %v624
        %v626 = vpop.f32.mrb[0].mxu0
        %v627 = vadd.f32 %v451, %v626
        %v628 = vpop.f32.mrb[0].mxu0
        %v629 = vadd.f32 %v451, %v628
        %630 = vmatprep.mubr.bf16.mxu0 0
        %631 = vmatmul.mubr.bf16.gmra.mrb[0].mxu0 %v568
        %v632 = vpop.f32.mrb[0].mxu0
        %v633 = vadd.f32 %v456, %v632
        %v634 = vpop.f32.mrb[0].mxu0
        %v635 = vadd.f32 %v456, %v634
        %v636 = vpop.f32.mrb[0].mxu0
        %v637 = vadd.f32 %v461, %v636
        %v638 = vpop.f32.mrb[0].mxu0
        %v639 = vadd.f32 %v461, %v638
        %640 = vmatprep.mubr.bf16.mxu0 0
        %641 = vmatmul.mubr.bf16.gmra.mrb[0].mxu0 %v571
        %v642 = vpop.f32.mrb[0].mxu0
        %v643 = vadd.f32 %v466, %v642
        %v644 = vpop.f32.mrb[0].mxu0
        %v645 = vadd.f32 %v466, %v644
        %v646 = vpop.f32.mrb[0].mxu0
        %v647 = vadd.f32 %v471, %v646
        %v648 = vpop.f32.mrb[0].mxu0
        %v649 = vadd.f32 %v471, %v648
        %650 = vmatprep.mubr.bf16.mxu0 0
        %651 = vmatmul.mubr.bf16.gmra.mrb[0].mxu0 %v574
        %v652 = vpop.f32.mrb[0].mxu0
        %v653 = vadd.f32 %v476, %v652
        %v654 = vpop.f32.mrb[0].mxu0
        %v655 = vadd.f32 %v476, %v654
        %v656 = vpop.f32.mrb[0].mxu0
        %v657 = vadd.f32 %v481, %v656
        %v658 = vpop.f32.mrb[0].mxu0
        %v659 = vadd.f32 %v481, %v658
        %660 = vmatprep.mubr.bf16.mxu0 0
        %661 = vmatmul.mubr.bf16.gmra.mrb[0].mxu0 %v577
        %v662 = vpop.f32.mrb[0].mxu0
        %v663 = vadd.f32 %v486, %v662
        %v664 = vpop.f32.mrb[0].mxu0
        %v665 = vadd.f32 %v486, %v664
        %v666 = vpop.f32.mrb[0].mxu0
        %v667 = vadd.f32 %v491, %v666
        %v668 = vpop.f32.mrb[0].mxu0
        %v669 = vadd.f32 %v491, %v668
        %670 = vmatprep.mubr.bf16.mxu0 0
        %671 = vmatmul.mubr.bf16.gmra.mrb[0].mxu0 %v580
        %v672 = vpop.f32.mrb[0].mxu0
        %v673 = vadd.f32 %v496, %v672
        %v674 = vpop.f32.mrb[0].mxu0
        %v675 = vadd.f32 %v496, %v674
        %v676 = vpop.f32.mrb[0].mxu0
        %v677 = vadd.f32 %v501, %v676
        %v678 = vpop.f32.mrb[0].mxu0
        %v679 = vadd.f32 %v501, %v678
        %680 = vmatprep.mubr.bf16.mxu0 0
        %681 = vmatmul.mubr.bf16.gmra.mrb[0].mxu0 %v583
        %v682 = vpop.f32.mrb[0].mxu0
        %v683 = vadd.f32 %v506, %v682
        %v684 = vpop.f32.mrb[0].mxu0
        %v685 = vadd.f32 %v506, %v684
        %v686 = vpop.f32.mrb[0].mxu0
        %v687 = vadd.f32 %v511, %v686
        %v688 = vpop.f32.mrb[0].mxu0
        %v689 = vadd.f32 %v511, %v688
        %690 = vmatprep.mubr.bf16.mxu0 0
        %691 = vmatmul.mubr.bf16.gmra.mrb[0].mxu0 %v586
        %v692 = vpop.f32.mrb[0].mxu0
        %v693 = vadd.f32 %v516, %v692
        %v694 = vpop.f32.mrb[0].mxu0
        %v695 = vadd.f32 %v516, %v694
        %v696 = vpop.f32.mrb[0].mxu0
        %v697 = vadd.f32 %v521, %v696
        %v698 = vpop.f32.mrb[0].mxu0
        %v699 = vadd.f32 %v521, %v698
        %700 = vdwg.mxu0
        %v701 = vld [vmem:[%s394] sm:$0xff]
        %v702 = vld [vmem:[%s394 + $0x8] sm:$0xff]
        %v703 = vld [vmem:[%s394 + $0x10] sm:$0xff]
        %v704 = vld [vmem:[%s394 + $0x18] sm:$0xff]
        %v705 = vld [vmem:[%s394 + $0x20] sm:$0xff]
        %v706 = vld [vmem:[%s394 + $0x28] sm:$0xff]
        %v707 = vld [vmem:[%s394 + $0x30] sm:$0xff]
        %v708 = vld [vmem:[%s394 + $0x38] sm:$0xff]
        %v709 = vld [vmem:[%s394 + $0x40] sm:$0xff]
        %v710 = vld [vmem:[%s394 + $0x48] sm:$0xff]
        %v711 = vld [vmem:[%s394 + $0x50] sm:$0xff]
        %v712 = vld [vmem:[%s394 + $0x58] sm:$0xff]
        %v713 = vld [vmem:[%s394 + $0x60] sm:$0xff]
        %v714 = vld [vmem:[%s394 + $0x68] sm:$0xff]
        %v715 = vld [vmem:[%s394 + $0x70] sm:$0xff]
        %v716 = vld [vmem:[%s394 + $0x78] sm:$0xff]
        %v717 = vadd.f32 %v623, %v701
        %v718 = vadd.f32 %v625, %v702
        %v719 = vadd.f32 %v627, %v703
        %v720 = vadd.f32 %v629, %v704
        %v721 = vadd.f32 %v633, %v705
        %v722 = vadd.f32 %v635, %v706
        %v723 = vadd.f32 %v637, %v707
        %v724 = vadd.f32 %v639, %v708
        %v725 = vadd.f32 %v643, %v709
        %v726 = vadd.f32 %v645, %v710
        %v727 = vadd.f32 %v647, %v711
        %v728 = vadd.f32 %v649, %v712
        %v729 = vadd.f32 %v653, %v713
        %v730 = vadd.f32 %v655, %v714
        %v731 = vadd.f32 %v657, %v715
        %v732 = vadd.f32 %v659, %v716
        %v733 = vmax.f32 %v717, 0.0
        %v734 = vmax.f32 %v718, 0.0
        %v735 = vmax.f32 %v719, 0.0
        %v736 = vmax.f32 %v720, 0.0
        %v737 = vmax.f32 %v721, 0.0
        %v738 = vmax.f32 %v722, 0.0
        %v739 = vmax.f32 %v723, 0.0
        %v740 = vmax.f32 %v724, 0.0
        %v741 = vmax.f32 %v725, 0.0
        %v742 = vmax.f32 %v726, 0.0
        %v743 = vmax.f32 %v727, 0.0
        %v744 = vmax.f32 %v728, 0.0
        %v745 = vmax.f32 %v729, 0.0
        %v746 = vmax.f32 %v730, 0.0
        %v747 = vmax.f32 %v731, 0.0
        %v748 = vmax.f32 %v732, 0.0
        %v749 = vmax.f32 %v663, 0.0
        %v750 = vmax.f32 %v665, 0.0
        %v751 = vmax.f32 %v667, 0.0
        %v752 = vmax.f32 %v669, 0.0
        %v753 = vmax.f32 %v673, 0.0
        %v754 = vmax.f32 %v675, 0.0
        %v755 = vmax.f32 %v677, 0.0
        %v756 = vmax.f32 %v679, 0.0
        %v757 = vmax.f32 %v683, 0.0
        %v758 = vmax.f32 %v685, 0.0
        %v759 = vmax.f32 %v687, 0.0
        %v760 = vmax.f32 %v689, 0.0
        %v761 = vmax.f32 %v693, 0.0
        %v762 = vmax.f32 %v695, 0.0
        %v763 = vmax.f32 %v697, 0.0
        %v764 = vmax.f32 %v699, 0.0
        %v765 = vpack.c.bf16 %v735, %v733
        %v766 = vpack.c.bf16 %v736, %v734
        %v767 = vpack.c.bf16 %v739, %v737
        %v768 = vpack.c.bf16 %v740, %v738
        %v769 = vpack.c.bf16 %v743, %v741
        %v770 = vpack.c.bf16 %v744, %v742
        %v771 = vpack.c.bf16 %v747, %v745
        %v772 = vpack.c.bf16 %v748, %v746
        %v773 = vpack.c.bf16 %v751, %v749
        %v774 = vpack.c.bf16 %v752, %v750
        %v775 = vpack.c.bf16 %v755, %v753
        %v776 = vpack.c.bf16 %v756, %v754
        %v777 = vpack.c.bf16 %v759, %v757
        %v778 = vpack.c.bf16 %v760, %v758
        %v779 = vpack.c.bf16 %v763, %v761
        %v780 = vpack.c.bf16 %v764, %v762
        %v781 = vld [vmem:[%s4] sm:$0xf]
        %v782 = vld [vmem:[%s4 + $0x4] sm:$0xf]
        %v783 = vld [vmem:[%s4 + $0x8] sm:$0xf]
        %v784 = vld [vmem:[%s4 + $0xc] sm:$0xf]
        %v785 = vld [vmem:[%s4 + $0x10] sm:$0xf]
        %v786 = vld [vmem:[%s4 + $0x14] sm:$0xf]
        %v787 = vld [vmem:[%s4 + $0x18] sm:$0xf]
        %v788 = vld [vmem:[%s4 + $0x1c] sm:$0xf]
        %v789 = vld [vmem:[%s4 + $0x20] sm:$0xf]
        %v790 = vld [vmem:[%s4 + $0x24] sm:$0xf]
        %v791 = vld [vmem:[%s4 + $0x28] sm:$0xf]
        %v792 = vld [vmem:[%s4 + $0x2c] sm:$0xf]
        %v793 = vld [vmem:[%s4 + $0x30] sm:$0xf]
        %v794 = vld [vmem:[%s4 + $0x34] sm:$0xf]
        %v795 = vld [vmem:[%s4 + $0x38] sm:$0xf]
        %v796 = vld [vmem:[%s4 + $0x3c] sm:$0xf]
        %v797 = vld [vmem:[%s5] sm:$0xff]
        %v798 = vld [vmem:[%s5 + $0x8] sm:$0xff]
        %v799 = vld [vmem:[%s5 + $0x10] sm:$0xff]
        %v800 = vld [vmem:[%s5 + $0x18] sm:$0xff]
        %v801 = vld [vmem:[%s5 + $0x20] sm:$0xff]
        %v802 = vld [vmem:[%s5 + $0x28] sm:$0xff]
        %v803 = vld [vmem:[%s5 + $0x30] sm:$0xff]
        %v804 = vld [vmem:[%s5 + $0x38] sm:$0xff]
        %v805 = vld [vmem:[%s5 + $0x40] sm:$0xff]
        %v806 = vld [vmem:[%s5 + $0x48] sm:$0xff]
        %v807 = vld [vmem:[%s5 + $0x50] sm:$0xff]
        %v808 = vld [vmem:[%s5 + $0x58] sm:$0xff]
        %v809 = vld [vmem:[%s5 + $0x60] sm:$0xff]
        %v810 = vld [vmem:[%s5 + $0x68] sm:$0xff]
        %v811 = vld [vmem:[%s5 + $0x70] sm:$0xff]
        %v812 = vld [vmem:[%s5 + $0x78] sm:$0xff]
        %814 = vset.pattern.permute.xlu0 0
        %815 = vperm.xlu0 %814, %v797
        %v816 = vpop.permute.xlu0 %815
        %819 = vset.pattern.permute.xlu0 0
        %820 = vperm.xlu0 %819, %v798
        %v821 = vpop.permute.xlu0 %820
        %824 = vset.pattern.permute.xlu0 0
        %825 = vperm.xlu0 %824, %v799
        %v826 = vpop.permute.xlu0 %825
        %829 = vset.pattern.permute.xlu0 0
        %830 = vperm.xlu0 %829, %v800
        %v831 = vpop.permute.xlu0 %830
        %834 = vset.pattern.permute.xlu0 0
        %835 = vperm.xlu0 %834, %v801
        %v836 = vpop.permute.xlu0 %835
        %839 = vset.pattern.permute.xlu0 0
        %840 = vperm.xlu0 %839, %v802
        %v841 = vpop.permute.xlu0 %840
        %844 = vset.pattern.permute.xlu0 0
        %845 = vperm.xlu0 %844, %v803
        %v846 = vpop.permute.xlu0 %845
        %849 = vset.pattern.permute.xlu0 0
        %850 = vperm.xlu0 %849, %v804
        %v851 = vpop.permute.xlu0 %850
        %854 = vset.pattern.permute.xlu0 0
        %855 = vperm.xlu0 %854, %v805
        %v856 = vpop.permute.xlu0 %855
        %859 = vset.pattern.permute.xlu0 0
        %860 = vperm.xlu0 %859, %v806
        %v861 = vpop.permute.xlu0 %860
        %864 = vset.pattern.permute.xlu0 0
        %865 = vperm.xlu0 %864, %v807
        %v866 = vpop.permute.xlu0 %865
        %869 = vset.pattern.permute.xlu0 0
        %870 = vperm.xlu0 %869, %v808
        %v871 = vpop.permute.xlu0 %870
        %874 = vset.pattern.permute.xlu0 0
        %875 = vperm.xlu0 %874, %v809
        %v876 = vpop.permute.xlu0 %875
        %879 = vset.pattern.permute.xlu0 0
        %880 = vperm.xlu0 %879, %v810
        %v881 = vpop.permute.xlu0 %880
        %884 = vset.pattern.permute.xlu0 0
        %885 = vperm.xlu0 %884, %v811
        %v886 = vpop.permute.xlu0 %885
        %889 = vset.pattern.permute.xlu0 0
        %890 = vperm.xlu0 %889, %v812
        %v891 = vpop.permute.xlu0 %890
        %v909 = vunpack.c.l.b16 %v781
        %v910 = vunpack.c.l.b16 %v782
        %v911 = vunpack.c.l.b16 %v783
        %v912 = vunpack.c.l.b16 %v784
        %v913 = vunpack.c.l.b16 %v785
        %v914 = vunpack.c.l.b16 %v786
        %v915 = vunpack.c.l.b16 %v787
        %v916 = vunpack.c.l.b16 %v788
        %v917 = vunpack.c.l.b16 %v789
        %v918 = vunpack.c.l.b16 %v790
        %v919 = vunpack.c.l.b16 %v791
        %v920 = vunpack.c.l.b16 %v792
        %v921 = vunpack.c.l.b16 %v793
        %v922 = vunpack.c.l.b16 %v794
        %v923 = vunpack.c.l.b16 %v795
        %v924 = vunpack.c.l.b16 %v796
        %v925 = vpack.c.b16 %v910, %v909
        %v926 = vpack.c.b16 %v912, %v911
        %v927 = vpack.c.b16 %v914, %v913
        %v928 = vpack.c.b16 %v916, %v915
        %v929 = vpack.c.b16 %v918, %v917
        %v930 = vpack.c.b16 %v920, %v919
        %v931 = vpack.c.b16 %v922, %v921
        %v932 = vpack.c.b16 %v924, %v923
        %941 = vmatprep.subr.bf16.mxu0 %v766
        %942 = vmatpush1.bf16.msra.mxu0 %v765
        %943 = vmatprep.subr.bf16.mxu0 %v768
        %944 = vmatpush1.bf16.msra.mxu0 %v767
        %945 = vmatprep.subr.bf16.mxu0 %v770
        %946 = vmatpush1.bf16.msra.mxu0 %v769
        %947 = vmatprep.subr.bf16.mxu0 %v772
        %948 = vmatpush1.bf16.msra.mxu0 %v771
        %949 = vmatprep.subr.bf16.mxu0 %v774
        %950 = vmatpush1.bf16.msra.mxu0 %v773
        %951 = vmatprep.subr.bf16.mxu0 %v776
        %952 = vmatpush1.bf16.msra.mxu0 %v775
        %953 = vmatprep.subr.bf16.mxu0 %v778
        %954 = vmatpush1.bf16.msra.mxu0 %v777
        %955 = vmatprep.subr.bf16.mxu0 %v780
        %956 = vmatpush1.bf16.msra.mxu0 %v779
        %957 = vmatprep.subr.bf16.mxu0 0
        %958 = vmatpush1.bf16.msra.mxu0 0
        %959 = vmatprep.subr.bf16.mxu0 0
        %960 = vmatpush1.bf16.msra.mxu0 0
        %961 = vmatprep.subr.bf16.mxu0 0
        %962 = vmatpush1.bf16.msra.mxu0 0
        %963 = vmatprep.subr.bf16.mxu0 0
        %964 = vmatpush1.bf16.msra.mxu0 0
        %965 = vmatprep.subr.bf16.mxu0 0
        %966 = vmatpush1.bf16.msra.mxu0 0
        %967 = vmatprep.subr.bf16.mxu0 0
        %968 = vmatpush1.bf16.msra.mxu0 0
        %969 = vmatprep.subr.bf16.mxu0 0
        %970 = vmatpush1.bf16.msra.mxu0 0
        %971 = vmatprep.subr.bf16.mxu0 0
        %972 = vmatpush1.bf16.msra.mxu0 0
        %973 = vmatprep.mubr.bf16.mxu0 0
        %974 = vmatmul.mubr.bf16.gmra.mrb[0].mxu0 %v925
        %v975 = vpop.f32.mrb[0].mxu0
        %v976 = vadd.f32 %v816, %v975
        %v977 = vpop.f32.mrb[0].mxu0
        %v978 = vadd.f32 %v816, %v977
        %v979 = vpop.f32.mrb[0].mxu0
        %v980 = vadd.f32 %v821, %v979
        %v981 = vpop.f32.mrb[0].mxu0
        %v982 = vadd.f32 %v821, %v981
        %983 = vmatprep.mubr.bf16.mxu0 0
        %984 = vmatmul.mubr.bf16.gmra.mrb[0].mxu0 %v926
        %v985 = vpop.f32.mrb[0].mxu0
        %v986 = vadd.f32 %v826, %v985
        %v987 = vpop.f32.mrb[0].mxu0
        %v988 = vadd.f32 %v826, %v987
        %v989 = vpop.f32.mrb[0].mxu0
        %v990 = vadd.f32 %v831, %v989
        %v991 = vpop.f32.mrb[0].mxu0
        %v992 = vadd.f32 %v831, %v991
        %993 = vmatprep.mubr.bf16.mxu0 0
        %994 = vmatmul.mubr.bf16.gmra.mrb[0].mxu0 %v927
        %v995 = vpop.f32.mrb[0].mxu0
        %v996 = vadd.f32 %v836, %v995
        %v997 = vpop.f32.mrb[0].mxu0
        %v998 = vadd.f32 %v836, %v997
        %v999 = vpop.f32.mrb[0].mxu0
        %v1000 = vadd.f32 %v841, %v999
        %v1001 = vpop.f32.mrb[0].mxu0
        %v1002 = vadd.f32 %v841, %v1001
        %1003 = vmatprep.mubr.bf16.mxu0 0
        %1004 = vmatmul.mubr.bf16.gmra.mrb[0].mxu0 %v928
        %v1005 = vpop.f32.mrb[0].mxu0
        %v1006 = vadd.f32 %v846, %v1005
        %v1007 = vpop.f32.mrb[0].mxu0
        %v1008 = vadd.f32 %v846, %v1007
        %v1009 = vpop.f32.mrb[0].mxu0
        %v1010 = vadd.f32 %v851, %v1009
        %v1011 = vpop.f32.mrb[0].mxu0
        %v1012 = vadd.f32 %v851, %v1011
        %1013 = vmatprep.mubr.bf16.mxu0 0
        %1014 = vmatmul.mubr.bf16.gmra.mrb[0].mxu0 %v929
        %v1015 = vpop.f32.mrb[0].mxu0
        %v1016 = vadd.f32 %v856, %v1015
        %v1017 = vpop.f32.mrb[0].mxu0
        %v1018 = vadd.f32 %v856, %v1017
        %v1019 = vpop.f32.mrb[0].mxu0
        %v1020 = vadd.f32 %v861, %v1019
        %v1021 = vpop.f32.mrb[0].mxu0
        %v1022 = vadd.f32 %v861, %v1021
        %1023 = vmatprep.mubr.bf16.mxu0 0
        %1024 = vmatmul.mubr.bf16.gmra.mrb[0].mxu0 %v930
        %v1025 = vpop.f32.mrb[0].mxu0
        %v1026 = vadd.f32 %v866, %v1025
        %v1027 = vpop.f32.mrb[0].mxu0
        %v1028 = vadd.f32 %v866, %v1027
        %v1029 = vpop.f32.mrb[0].mxu0
        %v1030 = vadd.f32 %v871, %v1029
        %v1031 = vpop.f32.mrb[0].mxu0
        %v1032 = vadd.f32 %v871, %v1031
        %1033 = vmatprep.mubr.bf16.mxu0 0
        %1034 = vmatmul.mubr.bf16.gmra.mrb[0].mxu0 %v931
        %v1035 = vpop.f32.mrb[0].mxu0
        %v1036 = vadd.f32 %v876, %v1035
        %v1037 = vpop.f32.mrb[0].mxu0
        %v1038 = vadd.f32 %v876, %v1037
        %v1039 = vpop.f32.mrb[0].mxu0
        %v1040 = vadd.f32 %v881, %v1039
        %v1041 = vpop.f32.mrb[0].mxu0
        %v1042 = vadd.f32 %v881, %v1041
        %1043 = vmatprep.mubr.bf16.mxu0 0
        %1044 = vmatmul.mubr.bf16.gmra.mrb[0].mxu0 %v932
        %v1045 = vpop.f32.mrb[0].mxu0
        %v1046 = vadd.f32 %v886, %v1045
        %v1047 = vpop.f32.mrb[0].mxu0
        %v1048 = vadd.f32 %v886, %v1047
        %v1049 = vpop.f32.mrb[0].mxu0
        %v1050 = vadd.f32 %v891, %v1049
        %v1051 = vpop.f32.mrb[0].mxu0
        %v1052 = vadd.f32 %v891, %v1051
        %1053 = vdwg.mxu0
        %v1054 = vmax.f32 %v976, 0.0
        %v1055 = vmax.f32 %v978, 0.0
        %v1056 = vmax.f32 %v980, 0.0
        %v1057 = vmax.f32 %v982, 0.0
        %v1058 = vmax.f32 %v986, 0.0
        %v1059 = vmax.f32 %v988, 0.0
        %v1060 = vmax.f32 %v990, 0.0
        %v1061 = vmax.f32 %v992, 0.0
        %v1062 = vmax.f32 %v996, 0.0
        %v1063 = vmax.f32 %v998, 0.0
        %v1064 = vmax.f32 %v1000, 0.0
        %v1065 = vmax.f32 %v1002, 0.0
        %v1066 = vmax.f32 %v1006, 0.0
        %v1067 = vmax.f32 %v1008, 0.0
        %v1068 = vmax.f32 %v1010, 0.0
        %v1069 = vmax.f32 %v1012, 0.0
        %v1070 = vmax.f32 %v1016, 0.0
        %v1071 = vmax.f32 %v1018, 0.0
        %v1072 = vmax.f32 %v1020, 0.0
        %v1073 = vmax.f32 %v1022, 0.0
        %v1074 = vmax.f32 %v1026, 0.0
        %v1075 = vmax.f32 %v1028, 0.0
        %v1076 = vmax.f32 %v1030, 0.0
        %v1077 = vmax.f32 %v1032, 0.0
        %v1078 = vmax.f32 %v1036, 0.0
        %v1079 = vmax.f32 %v1038, 0.0
        %v1080 = vmax.f32 %v1040, 0.0
        %v1081 = vmax.f32 %v1042, 0.0
        %v1082 = vmax.f32 %v1046, 0.0
        %v1083 = vmax.f32 %v1048, 0.0
        %v1084 = vmax.f32 %v1050, 0.0
        %v1085 = vmax.f32 %v1052, 0.0
        %v1086 = vpack.c.bf16 %v1056, %v1054
        %v1087 = vpack.c.bf16 %v1057, %v1055
        %v1088 = vpack.c.bf16 %v1060, %v1058
        %v1089 = vpack.c.bf16 %v1061, %v1059
        %v1090 = vpack.c.bf16 %v1064, %v1062
        %v1091 = vpack.c.bf16 %v1065, %v1063
        %v1092 = vpack.c.bf16 %v1068, %v1066
        %v1093 = vpack.c.bf16 %v1069, %v1067
        %v1094 = vpack.c.bf16 %v1072, %v1070
        %v1095 = vpack.c.bf16 %v1073, %v1071
        %v1096 = vpack.c.bf16 %v1076, %v1074
        %v1097 = vpack.c.bf16 %v1077, %v1075
        %v1098 = vpack.c.bf16 %v1080, %v1078
        %v1099 = vpack.c.bf16 %v1081, %v1079
        %v1100 = vpack.c.bf16 %v1084, %v1082
        %v1101 = vpack.c.bf16 %v1085, %v1083
        %v1102 = vld [vmem:[%s6] sm:$0xf]
        %v1103 = vld [vmem:[%s6 + $0x4] sm:$0xf]
        %v1104 = vld [vmem:[%s6 + $0x8] sm:$0xf]
        %v1105 = vld [vmem:[%s6 + $0xc] sm:$0xf]
        %v1106 = vld [vmem:[%s6 + $0x10] sm:$0xf]
        %v1107 = vld [vmem:[%s6 + $0x14] sm:$0xf]
        %v1108 = vld [vmem:[%s6 + $0x18] sm:$0xf]
        %v1109 = vld [vmem:[%s6 + $0x1c] sm:$0xf]
        %v1110 = vld [vmem:[%s6 + $0x20] sm:$0xf]
        %v1111 = vld [vmem:[%s6 + $0x24] sm:$0xf]
        %v1112 = vld [vmem:[%s7] sm:$0xff]
        %v1113 = vld [vmem:[%s7 + $0x8] sm:$0xff]
        %v1114 = vld [vmem:[%s7 + $0x10] sm:$0xff]
        %v1115 = vld [vmem:[%s7 + $0x18] sm:$0xff]
        %v1116 = vld [vmem:[%s7 + $0x20] sm:$0xff]
        %v1117 = vld [vmem:[%s7 + $0x28] sm:$0xff]
        %v1118 = vld [vmem:[%s7 + $0x30] sm:$0xff]
        %v1119 = vld [vmem:[%s7 + $0x38] sm:$0xff]
        %v1120 = vld [vmem:[%s7 + $0x40] sm:$0xff]
        %v1121 = vld [vmem:[%s7 + $0x48] sm:$0xff]
        %1123 = vset.pattern.permute.xlu0 0
        %1124 = vperm.xlu0 %1123, %v1112
        %v1125 = vpop.permute.xlu0 %1124
        %1128 = vset.pattern.permute.xlu0 0
        %1129 = vperm.xlu0 %1128, %v1113
        %v1130 = vpop.permute.xlu0 %1129
        %1133 = vset.pattern.permute.xlu0 0
        %1134 = vperm.xlu0 %1133, %v1114
        %v1135 = vpop.permute.xlu0 %1134
        %1138 = vset.pattern.permute.xlu0 0
        %1139 = vperm.xlu0 %1138, %v1115
        %v1140 = vpop.permute.xlu0 %1139
        %1143 = vset.pattern.permute.xlu0 0
        %1144 = vperm.xlu0 %1143, %v1116
        %v1145 = vpop.permute.xlu0 %1144
        %1148 = vset.pattern.permute.xlu0 0
        %1149 = vperm.xlu0 %1148, %v1117
        %v1150 = vpop.permute.xlu0 %1149
        %1153 = vset.pattern.permute.xlu0 0
        %1154 = vperm.xlu0 %1153, %v1118
        %v1155 = vpop.permute.xlu0 %1154
        %1158 = vset.pattern.permute.xlu0 0
        %1159 = vperm.xlu0 %1158, %v1119
        %v1160 = vpop.permute.xlu0 %1159
        %1163 = vset.pattern.permute.xlu0 0
        %1164 = vperm.xlu0 %1163, %v1120
        %v1165 = vpop.permute.xlu0 %1164
        %1168 = vset.pattern.permute.xlu0 0
        %1169 = vperm.xlu0 %1168, %v1121
        %v1170 = vpop.permute.xlu0 %1169
        %v1182 = vunpack.c.l.b16 %v1102
        %v1183 = vunpack.c.l.b16 %v1103
        %v1184 = vunpack.c.l.b16 %v1104
        %v1185 = vunpack.c.l.b16 %v1105
        %v1186 = vunpack.c.l.b16 %v1106
        %v1187 = vunpack.c.l.b16 %v1107
        %v1188 = vunpack.c.l.b16 %v1108
        %v1189 = vunpack.c.l.b16 %v1109
        %v1190 = vunpack.c.l.b16 %v1110
        %v1191 = vunpack.c.l.b16 %v1111
        %v1192 = vpack.c.b16 %v1183, %v1182
        %v1193 = vpack.c.b16 %v1185, %v1184
        %v1194 = vpack.c.b16 %v1187, %v1186
        %v1195 = vpack.c.b16 %v1189, %v1188
        %v1196 = vpack.c.b16 %v1191, %v1190
        %1202 = vmatprep.subr.bf16.mxu0 %v1087
        %1203 = vmatpush1.bf16.msra.mxu0 %v1086
        %1204 = vmatprep.subr.bf16.mxu0 %v1089
        %1205 = vmatpush1.bf16.msra.mxu0 %v1088
        %1206 = vmatprep.subr.bf16.mxu0 %v1091
        %1207 = vmatpush1.bf16.msra.mxu0 %v1090
        %1208 = vmatprep.subr.bf16.mxu0 %v1093
        %1209 = vmatpush1.bf16.msra.mxu0 %v1092
        %1210 = vmatprep.subr.bf16.mxu0 %v1095
        %1211 = vmatpush1.bf16.msra.mxu0 %v1094
        %1212 = vmatprep.subr.bf16.mxu0 %v1097
        %1213 = vmatpush1.bf16.msra.mxu0 %v1096
        %1214 = vmatprep.subr.bf16.mxu0 %v1099
        %1215 = vmatpush1.bf16.msra.mxu0 %v1098
        %1216 = vmatprep.subr.bf16.mxu0 %v1101
        %1217 = vmatpush1.bf16.msra.mxu0 %v1100
        %1218 = vmatprep.subr.bf16.mxu0 0
        %1219 = vmatpush1.bf16.msra.mxu0 0
        %1220 = vmatprep.subr.bf16.mxu0 0
        %1221 = vmatpush1.bf16.msra.mxu0 0
        %1222 = vmatprep.subr.bf16.mxu0 0
        %1223 = vmatpush1.bf16.msra.mxu0 0
        %1224 = vmatprep.subr.bf16.mxu0 0
        %1225 = vmatpush1.bf16.msra.mxu0 0
        %1226 = vmatprep.subr.bf16.mxu0 0
        %1227 = vmatpush1.bf16.msra.mxu0 0
        %1228 = vmatprep.subr.bf16.mxu0 0
        %1229 = vmatpush1.bf16.msra.mxu0 0
        %1230 = vmatprep.subr.bf16.mxu0 0
        %1231 = vmatpush1.bf16.msra.mxu0 0
        %1232 = vmatprep.subr.bf16.mxu0 0
        %1233 = vmatpush1.bf16.msra.mxu0 0
        %1234 = vmatprep.mubr.bf16.mxu0 0
        %1235 = vmatmul.mubr.bf16.gmra.mrb[0].mxu0 %v1192
        %v1236 = vpop.f32.mrb[0].mxu0
        %v1237 = vadd.f32 %v1125, %v1236
        %v1238 = vpop.f32.mrb[0].mxu0
        %v1239 = vadd.f32 %v1125, %v1238
        %v1240 = vpop.f32.mrb[0].mxu0
        %v1241 = vadd.f32 %v1130, %v1240
        %v1242 = vpop.f32.mrb[0].mxu0
        %v1243 = vadd.f32 %v1130, %v1242
        %1244 = vmatprep.mubr.bf16.mxu0 0
        %1245 = vmatmul.mubr.bf16.gmra.mrb[0].mxu0 %v1193
        %v1246 = vpop.f32.mrb[0].mxu0
        %v1247 = vadd.f32 %v1135, %v1246
        %v1248 = vpop.f32.mrb[0].mxu0
        %v1249 = vadd.f32 %v1135, %v1248
        %v1250 = vpop.f32.mrb[0].mxu0
        %v1251 = vadd.f32 %v1140, %v1250
        %v1252 = vpop.f32.mrb[0].mxu0
        %v1253 = vadd.f32 %v1140, %v1252
        %1254 = vmatprep.mubr.bf16.mxu0 0
        %1255 = vmatmul.mubr.bf16.gmra.mrb[0].mxu0 %v1194
        %v1256 = vpop.f32.mrb[0].mxu0
        %v1257 = vadd.f32 %v1145, %v1256
        %v1258 = vpop.f32.mrb[0].mxu0
        %v1259 = vadd.f32 %v1145, %v1258
        %v1260 = vpop.f32.mrb[0].mxu0
        %v1261 = vadd.f32 %v1150, %v1260
        %v1262 = vpop.f32.mrb[0].mxu0
        %v1263 = vadd.f32 %v1150, %v1262
        %1264 = vmatprep.mubr.bf16.mxu0 0
        %1265 = vmatmul.mubr.bf16.gmra.mrb[0].mxu0 %v1195
        %v1266 = vpop.f32.mrb[0].mxu0
        %v1267 = vadd.f32 %v1155, %v1266
        %v1268 = vpop.f32.mrb[0].mxu0
        %v1269 = vadd.f32 %v1155, %v1268
        %v1270 = vpop.f32.mrb[0].mxu0
        %v1271 = vadd.f32 %v1160, %v1270
        %v1272 = vpop.f32.mrb[0].mxu0
        %v1273 = vadd.f32 %v1160, %v1272
        %1274 = vmatprep.mubr.bf16.mxu0 0
        %1275 = vmatmul.mubr.bf16.gmra.mrb[0].mxu0 %v1196
        %v1276 = vpop.f32.mrb[0].mxu0
        %v1277 = vadd.f32 %v1165, %v1276
        %v1278 = vpop.f32.mrb[0].mxu0
        %v1279 = vadd.f32 %v1165, %v1278
        %v1280 = vpop.f32.mrb[0].mxu0
        %v1281 = vadd.f32 %v1170, %v1280
        %v1282 = vpop.f32.mrb[0].mxu0
        %v1283 = vadd.f32 %v1170, %v1282
        %1284 = vdwg.mxu0
        %v1285 = vtanh.pop %v1257
        %v1286 = vtanh.pop %v1259
        %v1287 = vtanh.pop %v1261
        %v1288 = vtanh.pop %v1263
        %v1289 = vtanh.pop %v1267
        %v1290 = vtanh.pop %v1269
        %v1291 = vtanh.pop %v1271
        %v1292 = vtanh.pop %v1273
        %v1293 = vmul.f32 %v1237, %v1237
        %v1294 = vmul.f32 %v1239, %v1239
        %v1295 = vmul.f32 %v1241, %v1241
        %v1296 = vmul.f32 %v1243, %v1243
        %v1297 = vmul.f32 %v1247, %v1247
        %v1298 = vmul.f32 %v1249, %v1249
        %v1299 = vmul.f32 %v1251, %v1251
        %v1300 = vmul.f32 %v1253, %v1253
        %v1301 = vadd.f32 %v1293, %v1295
        %v1302 = vadd.f32 %v1301, %v1297
        %v1303 = vadd.f32 %v1302, %v1299
        %v1304 = vrot.slane %v1303, 4
        %v1305 = vadd.f32 %v1303, %v1304
        %v1306 = vrot.slane %v1305, 2
        %v1307 = vadd.f32 %v1305, %v1306
        %v1308 = vrot.slane %v1307, 1
        %v1309 = vadd.f32 %v1307, %v1308
        %v1310 = vadd.f32 %v1294, %v1296
        %v1311 = vadd.f32 %v1310, %v1298
        %v1312 = vadd.f32 %v1311, %v1300
        %v1313 = vrot.slane %v1312, 4
        %v1314 = vadd.f32 %v1312, %v1313
        %v1315 = vrot.slane %v1314, 2
        %v1316 = vadd.f32 %v1314, %v1315
        %v1317 = vrot.slane %v1316, 1
        %v1318 = vadd.f32 %v1316, %v1317
        %v1319 = vrsqrt.pop %v1309
        %v1320 = vrsqrt.pop %v1318
        %v1321 = vmul.f32 %v1277, %v1319
        %v1322 = vmul.f32 %v1279, %v1320
        %v1323 = vmul.f32 %v1281, %v1319
        %v1324 = vmul.f32 %v1283, %v1320
        %v1325 = vmax.f32 %v1321, %v1323
        %v1326 = vrot.slane %v1325, 4
        %v1327 = vmax.f32 %v1325, %v1326
        %v1328 = vrot.slane %v1327, 2
        %v1329 = vmax.f32 %v1327, %v1328
        %v1330 = vrot.slane %v1329, 1
        %v1331 = vmax.f32 %v1329, %v1330
        %v1332 = vmax.f32 %v1322, %v1324
        %v1333 = vrot.slane %v1332, 4
        %v1334 = vmax.f32 %v1332, %v1333
        %v1335 = vrot.slane %v1334, 2
        %v1336 = vmax.f32 %v1334, %v1335
        %v1337 = vrot.slane %v1336, 1
        %v1338 = vmax.f32 %v1336, %v1337
        %v1339 = vsub.f32 %v1321, %v1331
        %v1340 = vsub.f32 %v1322, %v1338
        %v1341 = vsub.f32 %v1323, %v1331
        %v1342 = vsub.f32 %v1324, %v1338
        %v1343 = vmul.f32 %v1339, 1.442695
        %v1344 = vpow.pop %v1343
        %v1345 = vmul.f32 %v1340, 1.442695
        %v1346 = vpow.pop %v1345
        %v1347 = vmul.f32 %v1341, 1.442695
        %v1348 = vpow.pop %v1347
        %v1349 = vmul.f32 %v1342, 1.442695
        %v1350 = vpow.pop %v1349
        %v1351 = vrot.slane %v1348, 4
        %v1352 = vadd.f32 %v1348, %v1351
        %v1353 = vrot.slane %v1352, 2
        %v1354 = vadd.f32 %v1352, %v1353
        %v1355 = vrot.slane %v1354, 1
        %v1356 = vadd.f32 %v1354, %v1355
        %v1357 = vrot.slane %v1350, 4
        %v1358 = vadd.f32 %v1350, %v1357
        %v1359 = vrot.slane %v1358, 2
        %v1360 = vadd.f32 %v1358, %v1359
        %v1361 = vrot.slane %v1360, 1
        %v1362 = vadd.f32 %v1360, %v1361
        %v1363 = vadd.f32 %v1344, %v1348
        %v1364 = vrot.slane %v1363, 4
        %v1365 = vadd.f32 %v1363, %v1364
        %v1366 = vrot.slane %v1365, 2
        %v1367 = vadd.f32 %v1365, %v1366
        %v1368 = vrot.slane %v1367, 1
        %v1369 = vadd.f32 %v1367, %v1368
        %v1370 = vadd.f32 %v1346, %v1350
        %v1371 = vrot.slane %v1370, 4
        %v1372 = vadd.f32 %v1370, %v1371
        %v1373 = vrot.slane %v1372, 2
        %v1374 = vadd.f32 %v1372, %v1373
        %v1375 = vrot.slane %v1374, 1
        %v1376 = vadd.f32 %v1374, %v1375
        %v1377 = vrcp.pop %v1369
        %v1378 = vmul.f32 %v1356, %v1377
        %v1379 = vrcp.pop %v1376
        %v1380 = vmul.f32 %v1362, %v1379
        %v1381 = vmul.f32 %v1285, %v399
        %v1382 = vmul.f32 %v1286, %v400
        %v1383 = vmul.f32 %v1287, %v401
        %v1384 = vmul.f32 %v1288, %v402
        %v1385 = vmul.f32 %v1289, %v403
        %v1386 = vmul.f32 %v1290, %v404
        %v1387 = vmul.f32 %v1291, %v405
        %v1388 = vmul.f32 %v1292, %v406
        %v1389 = vmul.f32 %v1378, %v1381
        %v1390 = vmul.f32 %v1380, %v1382
        %v1391 = vmul.f32 %v1378, %v1383
        %v1392 = vmul.f32 %v1380, %v1384
        %v1393 = vmul.f32 %v1378, %v1385
        %v1394 = vmul.f32 %v1380, %v1386
        %v1395 = vmul.f32 %v1378, %v1387
        %v1396 = vmul.f32 %v1380, %v1388
        %1397 = vst [vmem:[%s372] sm:$0xff] %v1389
        %1398 = vst [vmem:[%s372 + $0x8] sm:$0xff] %v1390
        %1399 = vst [vmem:[%s372 + $0x10] sm:$0xff] %v1391
        %1400 = vst [vmem:[%s372 + $0x18] sm:$0xff] %v1392
        %1401 = vst [vmem:[%s372 + $0x20] sm:$0xff] %v1393
        %1402 = vst [vmem:[%s372 + $0x28] sm:$0xff] %v1394
        %1403 = vst [vmem:[%s372 + $0x30] sm:$0xff] %v1395
        %1404 = vst [vmem:[%s372 + $0x38] sm:$0xff] %v1396
        %v1407 = vcombine.low %v1378, %v1380
        %v1409 = vunpack.c.l.s4 1966171168
        %v1410 = vunpack.c.0.s8 %v1409
        %v1411 = vlaneseq
        %v1412 = vshrl.u32 %v1411, 7
        %v1413 = vsub.s32 %v1410, %v1412
        %v1414 = vrot.slane %v1407, %v1413
        %v1416 = vunpack.c.l.s4 1966171168
        %v1417 = vunpack.c.0.s8 %v1416
        %v1418 = vlaneseq
        %v1419 = vshrl.u32 %v1418, 7
        %v1420 = vsub.s32 %v1417, %v1419
        %v1421 = vrot.slane %v1414, %v1420
        %v1423 = vlaneseq
        %vm1424 = vcmp.ge.s32.totalorder %v1423, 0
        %vm1425 = vcmp.lt.s32.totalorder %v1423, 256
        %vm1426 = vmand %vm1424, %vm1425
        %1427 = vst.msk [vmem:[%s379] sm:$0x3] %vm1426, %v1421
        %s1428 = sand.u32 %s229, 1
        %s1429 = scalar_lea.sflag [#allocation3], %s1428
        %s1430 = sand.u32 %s229, 1
        %s1431 = smul.addr %s1430, 64
        %s1432 = scalar_lea.vmem [#allocation2], %s1431
        %s1433 = sand.u32 %s257, 1
        %s1434 = scalar_lea.sflag [#allocation5], %s1433
        %s1435 = sand.u32 %s257, 1
        %s1436 = smul.addr %s1435, 2
        %s1437 = scalar_lea.vmem [#allocation4], %s1436
        // Predicated region
        $region53: #{tpu_custom_call.1} parent=51 // pred_check
          %p1438 = pneg %p239
        $region54: #{tpu_custom_call.1} parent=51 // pred_check_branch
          %1440 = sbr.rel (%p1438) target = $region56
        $region55: #{tpu_custom_call.1} parent=51 // pred_region
          %s1441 = smul.u32 2, %s31
          %s1443 = ssub.s32 1024, 1024
          %1444 = vsyncadd %s1429, %s1443
          %s1445 = smul.addr %s32, 8
          %s1446 = sadd.s32 %s1441, %s1445
          %s1447 = smul.addr %s1446, 128
          %s1448 = scalar_lea.hbm %s8, %s1447
          %s1449 = sshll.u32 %s1432, 4
          %s1450 = int_to_ptr.vmem [resolvable:$true] %s1449
          %1455 = dma.vmem_to_hbm [thread:$0]  %s1450, 1024, %s1448, %s1429, 256, 256, 16
        $region56: #{tpu_custom_call.1} parent=51 // pred_fallthru
          _
        // Predicated region
        $region57: #{tpu_custom_call.1} parent=51 // pred_check
          %p1456 = pneg %p267
        $region58: #{tpu_custom_call.1} parent=51 // pred_check_branch
          %1458 = sbr.rel (%p1456) target = $region60
        $region59: #{tpu_custom_call.1} parent=51 // pred_region
          %s1459 = smul.u32 2, %s31
          %s1461 = ssub.s32 32, 32
          %1462 = vsyncadd %s1434, %s1461
          %s1463 = smul.addr %s32, 2
          %s1464 = sadd.s32 %s1459, %s1463
          %s1465 = smul.addr %s1464, 16
          %s1466 = scalar_lea.hbm %s9, %s1465
          %s1468 = sshll.u32 %s1437, 4
          %s1469 = int_to_ptr.vmem [resolvable:$true] %s1468
          %1471 = dma.vmem_to_hbm [thread:$0]  %s1469, 32, %s1466, %s1434
        $region60: #{tpu_custom_call.1} parent=51 // pred_fallthru
          _
      $region52: #{tpu_custom_call.1} parent=5 // pred_fallthru
        _
      %p1472 = scmp.le.s32.totalorder 2, %s22
      // Predicated region
      $region61: #{tpu_custom_call.1} parent=5 // pred_check
        %p1473 = pneg %p1472
      $region62: #{tpu_custom_call.1} parent=5 // pred_check_branch
        %1475 = sbr.rel (%p1473) target = $region64
      $region63: #{tpu_custom_call.1} parent=5 // pred_region
        %s1476 = ssub.s32 %s22, 2
        // Predicated region
        $region65: #{tpu_custom_call.1} parent=63 // pred_check
          %p1477 = pneg %p245
        $region66: #{tpu_custom_call.1} parent=63 // pred_check_branch
          %1479 = sbr.rel (%p1477) target = $region68
        $region67: #{tpu_custom_call.1} parent=63 // pred_region
          %s1480 = sand.u32 %s230, 1
          %s1481 = scalar_lea.sflag [#allocation3], %s1480
          %s1482 = sand.u32 %s230, 1
          %s1483 = smul.addr %s1482, 64
          %s1484 = scalar_lea.vmem [#allocation2], %s1483
          %1485 = dma.done %s1481, 1024
        $region68: #{tpu_custom_call.1} parent=63 // pred_fallthru
          _
        // Predicated region
        $region69: #{tpu_custom_call.1} parent=63 // pred_check
          %p1486 = pneg %p273
        $region70: #{tpu_custom_call.1} parent=63 // pred_check_branch
          %1488 = sbr.rel (%p1486) target = $region72
        $region71: #{tpu_custom_call.1} parent=63 // pred_region
          %s1489 = sand.u32 %s258, 1
          %s1490 = scalar_lea.sflag [#allocation5], %s1489
          %s1491 = sand.u32 %s258, 1
          %s1492 = smul.addr %s1491, 2
          %s1493 = scalar_lea.vmem [#allocation4], %s1492
          %1494 = dma.done %s1490, 32
        $region72: #{tpu_custom_call.1} parent=63 // pred_fallthru
          _
      $region64: #{tpu_custom_call.1} parent=5 // pred_fallthru
        _
    $region6: #{tpu_custom_call.1} parent=1 // loop_footer
      %s26 = sadd.s32 1, %s22
    $region7: #{tpu_custom_call.1} parent=1 // loop_footer_branch
      %21 = sbr.rel target = $region3
    $region8: #{tpu_custom_call.1} parent=1 // loop_exit
      _
    %1495 = vsyncpa [#allocation3], 1
    %s1496 = scalar_lea.sflag [#allocation3], 1
    %1497 = vsyncpa %s1496, 1
    %1498 = vsyncpa [#allocation5], 1
    %s1499 = scalar_lea.sflag [#allocation5], 1
    %1500 = vsyncpa %s1499, 1

</llo_original>
